<compile_context>
chip_gen: v5e
topology: v5e:2x2
jax: 0.10.0
libtpu: 0.0.40
codegen_flags: <defaults>
</compile_context>

<pallas_src>
import functools

import numpy as np

import jax
import jax.numpy as jnp
from jax.experimental import pallas as pl
from jax.experimental.pallas import tpu as pltpu

# ----------------------------- static model dims ----------------------------
C_IN, C1, C2, C_OUT = 4, 8, 16, 3          # input / enc1 / enc2 / head channels
H, W = 16, 16                              # full resolution
HO, WO = H // 2, W // 2                    # pooled resolution
M = H * W                                  # 256 pixels / image (lane axis)

# tap offsets on the flattened (row-major) pixel axis, tap k = (dh+1)*3 + (dw+1)
OFFS_FULL = tuple(dh * W + dw for dh in (-1, 0, 1) for dw in (-1, 0, 1))
OFFS_POOL = tuple(2 * o for o in OFFS_FULL)        # pooled conv in sparse layout
UP_OFFS = (0, -1, -W, -(W + 1))                    # parities (0,0),(0,1),(1,0),(1,1)


# ------------------------- in-kernel helper functions ------------------------

def _shift_lanes(x, off):
    """shifted[:, m] = x[:, m + off] if 0 <= m + off < L else 0 (static off)."""
    if off == 0:
        return x
    c, n = x.shape
    if off > 0:
        return jnp.concatenate([x[:, off:], jnp.zeros((c, off), x.dtype)], axis=1)
    return jnp.concatenate([jnp.zeros((c, -off), x.dtype), x[:, : n + off]], axis=1)


def _stack_taps(parts, tap_mask, offs):
    """Stacked-K conv input.

    For each tap k (in the 9-tap order matching the pre-reshaped weights), take the
    shifted view of every tensor in `parts`, multiply by the precomputed validity
    mask row, and stack everything along the contraction axis.

    parts:    list of [Ci, L] activations (channels on sublanes, pixels on lanes)
    tap_mask: [9, L] f32 constant (edge + per-image boundary validity per tap)
    offs:     9 static lane offsets (one per tap)
    returns:  [9 * sum(Ci), L]
    """
    L = parts[0].shape[1]
    maxo = max(abs(o) for o in offs)
    padded = []
    for xp in parts:                                  # pad once, slice 9 times
        z = jnp.zeros((xp.shape[0], maxo), xp.dtype)
        padded.append(jnp.concatenate([z, xp, z], axis=1))
    rows = []
    for k, off in enumerate(offs):
        m = tap_mask[k:k + 1, :]
        for xp in padded:
            rows.append(xp[:, maxo + off: maxo + off + L] * m)
    return jnp.concatenate(rows, axis=0)


# ---------------------------------- kernel -----------------------------------

def _fused_unet_kernel(x_ref, mf_ref, mp_ref, up_ref,
                       w1_ref, b1_ref, w2_ref, b2_ref, w3_ref, b3_ref,
                       wt_ref, bt_ref, o_ref):
    x = x_ref[0]                 # [C_IN, L]   (B_blk images side-by-side on lanes)
    mf = mf_ref[...]             # [9, L] full-res tap validity (edges + image bounds)
    mp = mp_ref[...]             # [9, L] pooled tap validity (2x2 anchors only)
    up = up_ref[...]             # [4, L] parity masks for nearest-neighbour upsample

    # enc1: 3x3 conv (4 -> 8) + ReLU  — single K=36 matmul
    e1 = jnp.maximum(
        jnp.dot(w1_ref[...], _stack_taps([x], mf, OFFS_FULL),
                preferred_element_type=jnp.float32) + b1_ref[...], 0.0)

    # 2x2 max-pool stride 2, kept sparse at full lane width (valid at anchors only)
    pmax = jnp.maximum(jnp.maximum(e1, _shift_lanes(e1, 1)),
                       jnp.maximum(_shift_lanes(e1, W), _shift_lanes(e1, W + 1)))

    # enc2: 3x3 conv (8 -> 16) + ReLU at pooled resolution (doubled offsets + anchor masks)
    e2 = jnp.maximum(
        jnp.dot(w2_ref[...], _stack_taps([pmax], mp, OFFS_POOL),
                preferred_element_type=jnp.float32) + b2_ref[...], 0.0)

    # nearest-neighbour 2x upsample: each pixel copies its 2x2 anchor value
    u1 = (e2 * up[0:1]
          + _shift_lanes(e2, UP_OFFS[1]) * up[1:2]
          + _shift_lanes(e2, UP_OFFS[2]) * up[2:3]
          + _shift_lanes(e2, UP_OFFS[3]) * up[3:4])

    # dec1: 3x3 conv over concat([e1, up(e2)]) + ReLU  — single K=216 matmul
    d1 = jnp.maximum(
        jnp.dot(w3_ref[...], _stack_taps([e1, u1], mf, OFFS_FULL),
                preferred_element_type=jnp.float32) + b3_ref[...], 0.0)

    # top: 1x1 conv (8 -> 3), no activation
    out = jnp.dot(wt_ref[...], d1, preferred_element_type=jnp.float32) + bt_ref[...]
    o_ref[0] = out.astype(o_ref.dtype)


# --------------------------------- wrapper -----------------------------------

def _stack_w(w_oihw):
    """[Cout, Cin, 3, 3] -> [Cout, 9*Cin], column = (kh*3 + kw)*Cin + cin."""
    co, ci = w_oihw.shape[0], w_oihw.shape[1]
    return jnp.transpose(w_oihw, (0, 2, 3, 1)).reshape(co, 9 * ci)


def _build_masks(b_blk):
    """Constant per-tap validity / parity masks over the batched lane axis."""
    L = b_blk * M
    p = np.arange(L)
    h = (p % M) // W
    w = p % W
    anchor = (h % 2 == 0) & (w % 2 == 0)
    mf = np.zeros((9, L), np.float32)
    mpool = np.zeros((9, L), np.float32)
    k = 0
    for dh in (-1, 0, 1):
        for dw in (-1, 0, 1):
            mf[k] = ((h + dh >= 0) & (h + dh < H) & (w + dw >= 0) & (w + dw < W))
            mpool[k] = (anchor
                        & (h // 2 + dh >= 0) & (h // 2 + dh < HO)
                        & (w // 2 + dw >= 0) & (w // 2 + dw < WO))
            k += 1
    upar = np.zeros((4, L), np.float32)
    j = 0
    for ph in (0, 1):
        for pw in (0, 1):
            upar[j] = (h % 2 == ph) & (w % 2 == pw)
            j += 1
    return mf, mpool, upar


def _pick_block(n):
    """Images folded onto the lane axis per grid step.  Prefer wide lane blocks but
    keep >= 2 grid steps when possible (v7x has 2 TensorCores)."""
    for b in (8, 4, 2, 1):
        if n % b == 0 and n // b >= 2:
            return b
    return max(n, 1)


def full_model_single(params, x_nchw, base_trainable=True, block_images=None):
    """Forward of FullModelSingle: out = top(base(x)); NCHW in, NCHW out."""
    n = x_nchw.shape[0]
    assert x_nchw.shape[1:] == (C_IN, H, W), x_nchw.shape
    if block_images is None:
        block_images = _pick_block(n)
    assert n % block_images == 0
    g = n // block_images
    L = block_images * M

    p = dict(params)
    if not base_trainable:
        # TODO(synk): torch.no_grad() also blocks input-gradients through the base;
        # forward values are identical, here we only freeze the base parameters.
        for k in ("enc1_w", "enc1_b", "enc2_w", "enc2_b", "dec1_w", "dec1_b"):
            p[k] = jax.lax.stop_gradient(p[k])

    # [n, C, H, W] -> [g, C, B_blk*M]: B_blk images side-by-side on the lane axis
    x2 = (x_nchw.astype(jnp.float32)
          .reshape(g, block_images, C_IN, M)
          .transpose(0, 2, 1, 3)
          .reshape(g, C_IN, L))

    mf, mpool, upar = _build_masks(block_images)
    w1 = _stack_w(p["enc1_w"]);  b1 = p["enc1_b"].reshape(C1, 1)
    w2 = _stack_w(p["enc2_w"]);  b2 = p["enc2_b"].reshape(C2, 1)
    w3 = _stack_w(p["dec1_w"]);  b3 = p["dec1_b"].reshape(C1, 1)
    wt = p["top_w"].reshape(C_OUT, C1)
    bt = p["top_b"].reshape(C_OUT, 1)

    macs_per_px = 9 * C_IN * C1 + 9 * C1 * C2 + 9 * (C1 + C2) * C1 + C1 * C_OUT
    flops = 2 * n * M * macs_per_px
    bytes_accessed = 4 * (n * (C_IN + C_OUT) * M + 22 * L
                          + 9 * (C1 * C_IN + C2 * C1 + C1 * (C1 + C2))
                          + C_OUT * C1 + 2 * C1 + C2 + C_OUT)

    out = pl.pallas_call(
        _fused_unet_kernel,
        out_shape=jax.ShapeDtypeStruct((g, C_OUT, L), jnp.float32),
        grid=(g,),
        in_specs=[
            pl.BlockSpec((1, C_IN, L), lambda i: (i, 0, 0)),      # x (B_blk images/step)
            pl.BlockSpec((9, L), lambda i: (0, 0)),               # full-res tap masks
            pl.BlockSpec((9, L), lambda i: (0, 0)),               # pooled tap masks
            pl.BlockSpec((4, L), lambda i: (0, 0)),               # upsample parity masks
            pl.BlockSpec((C1, 9 * C_IN), lambda i: (0, 0)),       # enc1 weight [8,36]
            pl.BlockSpec((C1, 1), lambda i: (0, 0)),              # enc1 bias
            pl.BlockSpec((C2, 9 * C1), lambda i: (0, 0)),         # enc2 weight [16,72]
            pl.BlockSpec((C2, 1), lambda i: (0, 0)),              # enc2 bias
            pl.BlockSpec((C1, 9 * (C1 + C2)), lambda i: (0, 0)),  # dec1 weight [8,216]
            pl.BlockSpec((C1, 1), lambda i: (0, 0)),              # dec1 bias
            pl.BlockSpec((C_OUT, C1), lambda i: (0, 0)),          # top weight
            pl.BlockSpec((C_OUT, 1), lambda i: (0, 0)),           # top bias
        ],
        out_specs=pl.BlockSpec((1, C_OUT, L), lambda i: (i, 0, 0)),
        compiler_params=pltpu.CompilerParams(
            dimension_semantics=("parallel",)),                   # v7x: split grid over TCs
        cost_estimate=pl.CostEstimate(flops=flops, transcendentals=0,
                                      bytes_accessed=bytes_accessed),
    )(x2, jnp.asarray(mf), jnp.asarray(mpool), jnp.asarray(upar),
      w1, b1, w2, b2, w3, b3, wt, bt)

    return (out.reshape(g, C_OUT, block_images, M)
               .transpose(0, 2, 1, 3)
               .reshape(n, C_OUT, H, W))


# ----------------------------- params & reference ----------------------------

def init_params(key):
    """Deterministic synthetic parameters (mini U-Net base + 1x1-conv top head)."""
    ks = jax.random.split(key, 8)

    def w(k, shape):
        return 0.1 * jax.random.normal(k, shape, jnp.float32)

    return {
        "enc1_w": w(ks[0], (C1, C_IN, 3, 3)),    "enc1_b": w(ks[1], (C1,)),
        "enc2_w": w(ks[2], (C2, C1, 3, 3)),      "enc2_b": w(ks[3], (C2,)),
        "dec1_w": w(ks[4], (C1, C1 + C2, 3, 3)), "dec1_b": w(ks[5], (C1,)),
        "top_w":  w(ks[6], (C_OUT, C1, 1, 1)),   "top_b": w(ks[7], (C_OUT,)),
    }


def _ref_conv(x, w, b, padding):
    y = jax.lax.conv_general_dilated(
        x, w, window_strides=(1, 1), padding=padding,
        dimension_numbers=("NCHW", "OIHW", "NCHW"))
    return y + b.reshape(1, -1, 1, 1)


def _reference_forward(params, x):
    """Pure-JAX/XLA reference of the same forward (for correctness checking)."""
    e1 = jax.nn.relu(_ref_conv(x, params["enc1_w"], params["enc1_b"], ((1, 1), (1, 1))))
    p1 = jax.lax.reduce_window(e1, -jnp.inf, jax.lax.max,
                               (1, 1, 2, 2), (1, 1, 2, 2), "VALID")
    e2 = jax.nn.relu(_ref_conv(p1, params["enc2_w"], params["enc2_b"], ((1, 1), (1, 1))))
    u1 = jnp.repeat(jnp.repeat(e2, 2, axis=2), 2, axis=3)
    cat = jnp.concatenate([e1, u1], axis=1)
    d1 = jax.nn.relu(_ref_conv(cat, params["dec1_w"], params["dec1_b"], ((1, 1), (1, 1))))
    return _ref_conv(d1, params["top_w"], params["top_b"], ((0, 0), (0, 0)))


# ------------------------------------ main ------------------------------------

if __name__ == "__main__":
    key = jax.random.PRNGKey(0)
    kp, kx = jax.random.split(key)
    params = init_params(kp)
    x = jax.random.normal(kx, (2, C_IN, H, W), jnp.float32)   # NCHW, like PyTorch

    fwd = jax.jit(functools.partial(full_model_single, base_trainable=True))
    out = jax.block_until_ready(fwd(params, x))
    assert out.shape == (2, C_OUT, H, W), out.shape
    assert bool(jnp.all(jnp.isfinite(out)))

    ref = jax.block_until_ready(_reference_forward(params, x))
    err = float(jnp.max(jnp.abs(out - ref)))
    assert err < 5e-3, f"max abs error vs reference: {err}"
    print("KERNEL_OK")
</pallas_src>

<mosaic_0001>
module attributes {stable_mosaic.version = 11 : i64} {
  func.func @_fused_unet_kernel(%arg0: i32, %arg1: memref<1x4x256xf32, #tpu.memory_space<vmem>>, %arg2: memref<9x256xf32, #tpu.memory_space<vmem>>, %arg3: memref<9x256xf32, #tpu.memory_space<vmem>>, %arg4: memref<4x256xf32, #tpu.memory_space<vmem>>, %arg5: memref<8x36xf32, #tpu.memory_space<vmem>>, %arg6: memref<8x1xf32, #tpu.memory_space<vmem>>, %arg7: memref<16x72xf32, #tpu.memory_space<vmem>>, %arg8: memref<16x1xf32, #tpu.memory_space<vmem>>, %arg9: memref<8x216xf32, #tpu.memory_space<vmem>>, %arg10: memref<8x1xf32, #tpu.memory_space<vmem>>, %arg11: memref<3x8xf32, #tpu.memory_space<vmem>>, %arg12: memref<3x1xf32, #tpu.memory_space<vmem>>, %arg13: memref<1x3x256xf32, #tpu.memory_space<vmem>>) attributes {dimension_semantics = [#tpu.dimension_semantics<parallel>], iteration_bounds = array<i64: 2>, scalar_prefetch = 0 : i64, scratch_operands = 0 : i64, tpu.core_type = #tpu.core_type<tc>, window_params = [{transform_indices = @transform_0, window_bounds = array<i64: 1, 4, 256>}, {pipeline_mode = #tpu.pipeline_mode<synchronous>, transform_indices = @transform_1, window_bounds = array<i64: 9, 256>}, {pipeline_mode = #tpu.pipeline_mode<synchronous>, transform_indices = @transform_2, window_bounds = array<i64: 9, 256>}, {pipeline_mode = #tpu.pipeline_mode<synchronous>, transform_indices = @transform_3, window_bounds = array<i64: 4, 256>}, {pipeline_mode = #tpu.pipeline_mode<synchronous>, transform_indices = @transform_4, window_bounds = array<i64: 8, 36>}, {pipeline_mode = #tpu.pipeline_mode<synchronous>, transform_indices = @transform_5, window_bounds = array<i64: 8, 1>}, {pipeline_mode = #tpu.pipeline_mode<synchronous>, transform_indices = @transform_6, window_bounds = array<i64: 16, 72>}, {pipeline_mode = #tpu.pipeline_mode<synchronous>, transform_indices = @transform_7, window_bounds = array<i64: 16, 1>}, {pipeline_mode = #tpu.pipeline_mode<synchronous>, transform_indices = @transform_8, window_bounds = array<i64: 8, 216>}, {pipeline_mode = #tpu.pipeline_mode<synchronous>, transform_indices = @transform_9, window_bounds = array<i64: 8, 1>}, {pipeline_mode = #tpu.pipeline_mode<synchronous>, transform_indices = @transform_10, window_bounds = array<i64: 3, 8>}, {pipeline_mode = #tpu.pipeline_mode<synchronous>, transform_indices = @transform_11, window_bounds = array<i64: 3, 1>}, {transform_indices = @transform_12, window_bounds = array<i64: 1, 3, 256>}]} {
    %c0 = arith.constant 0 : index
    %c0_0 = arith.constant 0 : index
    %c0_1 = arith.constant 0 : index
    %0 = vector.load %arg1[%c0, %c0_0, %c0_1] : memref<1x4x256xf32, #tpu.memory_space<vmem>>, vector<1x4x256xf32>
    %1 = vector.shape_cast %0 : vector<1x4x256xf32> to vector<4x256xf32>
    %c0_2 = arith.constant 0 : index
    %c0_3 = arith.constant 0 : index
    %2 = vector.load %arg2[%c0_2, %c0_3] : memref<9x256xf32, #tpu.memory_space<vmem>>, vector<9x256xf32>
    %c0_4 = arith.constant 0 : index
    %c0_5 = arith.constant 0 : index
    %3 = vector.load %arg3[%c0_4, %c0_5] : memref<9x256xf32, #tpu.memory_space<vmem>>, vector<9x256xf32>
    %c0_6 = arith.constant 0 : index
    %c0_7 = arith.constant 0 : index
    %4 = vector.load %arg4[%c0_6, %c0_7] : memref<4x256xf32, #tpu.memory_space<vmem>>, vector<4x256xf32>
    %c0_8 = arith.constant 0 : index
    %c0_9 = arith.constant 0 : index
    %5 = vector.load %arg5[%c0_8, %c0_9] : memref<8x36xf32, #tpu.memory_space<vmem>>, vector<8x36xf32>
    %cst = arith.constant 0.000000e+00 : f32
    %6 = vector.broadcast %cst : f32 to vector<4x17xf32>
    %7 = tpu.concatenate %6, %1, %6 in 1 : vector<4x17xf32>, vector<4x256xf32>, vector<4x17xf32> -> vector<4x290xf32>
    %8 = vector.extract_strided_slice %2 {offsets = [0, 0], sizes = [1, 256], strides = [1, 1]} : vector<9x256xf32> to vector<1x256xf32>
    %9 = vector.extract_strided_slice %7 {offsets = [0, 0], sizes = [4, 256], strides = [1, 1]} : vector<4x290xf32> to vector<4x256xf32>
    %10 = vector.broadcast %8 : vector<1x256xf32> to vector<4x256xf32>
    %11 = arith.mulf %9, %10 : vector<4x256xf32>
    %12 = vector.extract_strided_slice %2 {offsets = [1, 0], sizes = [1, 256], strides = [1, 1]} : vector<9x256xf32> to vector<1x256xf32>
    %13 = vector.extract_strided_slice %7 {offsets = [0, 1], sizes = [4, 256], strides = [1, 1]} : vector<4x290xf32> to vector<4x256xf32>
    %14 = vector.broadcast %12 : vector<1x256xf32> to vector<4x256xf32>
    %15 = arith.mulf %13, %14 : vector<4x256xf32>
    %16 = vector.extract_strided_slice %2 {offsets = [2, 0], sizes = [1, 256], strides = [1, 1]} : vector<9x256xf32> to vector<1x256xf32>
    %17 = vector.extract_strided_slice %7 {offsets = [0, 2], sizes = [4, 256], strides = [1, 1]} : vector<4x290xf32> to vector<4x256xf32>
    %18 = vector.broadcast %16 : vector<1x256xf32> to vector<4x256xf32>
    %19 = arith.mulf %17, %18 : vector<4x256xf32>
    %20 = vector.extract_strided_slice %2 {offsets = [3, 0], sizes = [1, 256], strides = [1, 1]} : vector<9x256xf32> to vector<1x256xf32>
    %21 = vector.extract_strided_slice %7 {offsets = [0, 16], sizes = [4, 256], strides = [1, 1]} : vector<4x290xf32> to vector<4x256xf32>
    %22 = vector.broadcast %20 : vector<1x256xf32> to vector<4x256xf32>
    %23 = arith.mulf %21, %22 : vector<4x256xf32>
    %24 = vector.extract_strided_slice %2 {offsets = [4, 0], sizes = [1, 256], strides = [1, 1]} : vector<9x256xf32> to vector<1x256xf32>
    %25 = vector.extract_strided_slice %7 {offsets = [0, 17], sizes = [4, 256], strides = [1, 1]} : vector<4x290xf32> to vector<4x256xf32>
    %26 = vector.broadcast %24 : vector<1x256xf32> to vector<4x256xf32>
    %27 = arith.mulf %25, %26 : vector<4x256xf32>
    %28 = vector.extract_strided_slice %2 {offsets = [5, 0], sizes = [1, 256], strides = [1, 1]} : vector<9x256xf32> to vector<1x256xf32>
    %29 = vector.extract_strided_slice %7 {offsets = [0, 18], sizes = [4, 256], strides = [1, 1]} : vector<4x290xf32> to vector<4x256xf32>
    %30 = vector.broadcast %28 : vector<1x256xf32> to vector<4x256xf32>
    %31 = arith.mulf %29, %30 : vector<4x256xf32>
    %32 = vector.extract_strided_slice %2 {offsets = [6, 0], sizes = [1, 256], strides = [1, 1]} : vector<9x256xf32> to vector<1x256xf32>
    %33 = vector.extract_strided_slice %7 {offsets = [0, 32], sizes = [4, 256], strides = [1, 1]} : vector<4x290xf32> to vector<4x256xf32>
    %34 = vector.broadcast %32 : vector<1x256xf32> to vector<4x256xf32>
    %35 = arith.mulf %33, %34 : vector<4x256xf32>
    %36 = vector.extract_strided_slice %2 {offsets = [7, 0], sizes = [1, 256], strides = [1, 1]} : vector<9x256xf32> to vector<1x256xf32>
    %37 = vector.extract_strided_slice %7 {offsets = [0, 33], sizes = [4, 256], strides = [1, 1]} : vector<4x290xf32> to vector<4x256xf32>
    %38 = vector.broadcast %36 : vector<1x256xf32> to vector<4x256xf32>
    %39 = arith.mulf %37, %38 : vector<4x256xf32>
    %40 = vector.extract_strided_slice %2 {offsets = [8, 0], sizes = [1, 256], strides = [1, 1]} : vector<9x256xf32> to vector<1x256xf32>
    %41 = vector.extract_strided_slice %7 {offsets = [0, 34], sizes = [4, 256], strides = [1, 1]} : vector<4x290xf32> to vector<4x256xf32>
    %42 = vector.broadcast %40 : vector<1x256xf32> to vector<4x256xf32>
    %43 = arith.mulf %41, %42 : vector<4x256xf32>
    %44 = tpu.concatenate %11, %15, %19, %23, %27, %31, %35, %39, %43 in 0 : vector<4x256xf32>, vector<4x256xf32>, vector<4x256xf32>, vector<4x256xf32>, vector<4x256xf32>, vector<4x256xf32>, vector<4x256xf32>, vector<4x256xf32>, vector<4x256xf32> -> vector<36x256xf32>
    %cst_10 = arith.constant dense<0.000000e+00> : vector<8x256xf32>
    %45 = tpu.matmul %5, %44, %cst_10 {dimension_numbers = #tpu.dot_dimension_numbers<[1], [0], [0], [1], [0, 0, 1, 1], [], []>} : vector<8x36xf32>, vector<36x256xf32>, vector<8x256xf32> -> vector<8x256xf32>
    %c0_11 = arith.constant 0 : index
    %c0_12 = arith.constant 0 : index
    %46 = vector.load %arg6[%c0_11, %c0_12] : memref<8x1xf32, #tpu.memory_space<vmem>>, vector<8x1xf32>
    %47 = vector.broadcast %46 : vector<8x1xf32> to vector<8x256xf32>
    %48 = arith.addf %45, %47 : vector<8x256xf32>
    %cst_13 = arith.constant 0.000000e+00 : f32
    %49 = vector.broadcast %cst_13 : f32 to vector<8x256xf32>
    %50 = arith.maximumf %48, %49 : vector<8x256xf32>
    %51 = vector.extract_strided_slice %50 {offsets = [0, 1], sizes = [8, 255], strides = [1, 1]} : vector<8x256xf32> to vector<8x255xf32>
    %cst_14 = arith.constant 0.000000e+00 : f32
    %52 = vector.broadcast %cst_14 : f32 to vector<8x1xf32>
    %53 = tpu.concatenate %51, %52 in 1 : vector<8x255xf32>, vector<8x1xf32> -> vector<8x256xf32>
    %54 = arith.maximumf %50, %53 : vector<8x256xf32>
    %55 = vector.extract_strided_slice %50 {offsets = [0, 16], sizes = [8, 240], strides = [1, 1]} : vector<8x256xf32> to vector<8x240xf32>
    %cst_15 = arith.constant 0.000000e+00 : f32
    %56 = vector.broadcast %cst_15 : f32 to vector<8x16xf32>
    %57 = tpu.concatenate %55, %56 in 1 : vector<8x240xf32>, vector<8x16xf32> -> vector<8x256xf32>
    %58 = vector.extract_strided_slice %50 {offsets = [0, 17], sizes = [8, 239], strides = [1, 1]} : vector<8x256xf32> to vector<8x239xf32>
    %cst_16 = arith.constant 0.000000e+00 : f32
    %59 = vector.broadcast %cst_16 : f32 to vector<8x17xf32>
    %60 = tpu.concatenate %58, %59 in 1 : vector<8x239xf32>, vector<8x17xf32> -> vector<8x256xf32>
    %61 = arith.maximumf %57, %60 : vector<8x256xf32>
    %62 = arith.maximumf %54, %61 : vector<8x256xf32>
    %c0_17 = arith.constant 0 : index
    %c0_18 = arith.constant 0 : index
    %63 = vector.load %arg7[%c0_17, %c0_18] : memref<16x72xf32, #tpu.memory_space<vmem>>, vector<16x72xf32>
    %cst_19 = arith.constant 0.000000e+00 : f32
    %64 = vector.broadcast %cst_19 : f32 to vector<8x34xf32>
    %65 = tpu.concatenate %64, %62, %64 in 1 : vector<8x34xf32>, vector<8x256xf32>, vector<8x34xf32> -> vector<8x324xf32>
    %66 = vector.extract_strided_slice %3 {offsets = [0, 0], sizes = [1, 256], strides = [1, 1]} : vector<9x256xf32> to vector<1x256xf32>
    %67 = vector.extract_strided_slice %65 {offsets = [0, 0], sizes = [8, 256], strides = [1, 1]} : vector<8x324xf32> to vector<8x256xf32>
    %68 = vector.broadcast %66 : vector<1x256xf32> to vector<8x256xf32>
    %69 = arith.mulf %67, %68 : vector<8x256xf32>
    %70 = vector.extract_strided_slice %3 {offsets = [1, 0], sizes = [1, 256], strides = [1, 1]} : vector<9x256xf32> to vector<1x256xf32>
    %71 = vector.extract_strided_slice %65 {offsets = [0, 2], sizes = [8, 256], strides = [1, 1]} : vector<8x324xf32> to vector<8x256xf32>
    %72 = vector.broadcast %70 : vector<1x256xf32> to vector<8x256xf32>
    %73 = arith.mulf %71, %72 : vector<8x256xf32>
    %74 = vector.extract_strided_slice %3 {offsets = [2, 0], sizes = [1, 256], strides = [1, 1]} : vector<9x256xf32> to vector<1x256xf32>
    %75 = vector.extract_strided_slice %65 {offsets = [0, 4], sizes = [8, 256], strides = [1, 1]} : vector<8x324xf32> to vector<8x256xf32>
    %76 = vector.broadcast %74 : vector<1x256xf32> to vector<8x256xf32>
    %77 = arith.mulf %75, %76 : vector<8x256xf32>
    %78 = vector.extract_strided_slice %3 {offsets = [3, 0], sizes = [1, 256], strides = [1, 1]} : vector<9x256xf32> to vector<1x256xf32>
    %79 = vector.extract_strided_slice %65 {offsets = [0, 32], sizes = [8, 256], strides = [1, 1]} : vector<8x324xf32> to vector<8x256xf32>
    %80 = vector.broadcast %78 : vector<1x256xf32> to vector<8x256xf32>
    %81 = arith.mulf %79, %80 : vector<8x256xf32>
    %82 = vector.extract_strided_slice %3 {offsets = [4, 0], sizes = [1, 256], strides = [1, 1]} : vector<9x256xf32> to vector<1x256xf32>
    %83 = vector.extract_strided_slice %65 {offsets = [0, 34], sizes = [8, 256], strides = [1, 1]} : vector<8x324xf32> to vector<8x256xf32>
    %84 = vector.broadcast %82 : vector<1x256xf32> to vector<8x256xf32>
    %85 = arith.mulf %83, %84 : vector<8x256xf32>
    %86 = vector.extract_strided_slice %3 {offsets = [5, 0], sizes = [1, 256], strides = [1, 1]} : vector<9x256xf32> to vector<1x256xf32>
    %87 = vector.extract_strided_slice %65 {offsets = [0, 36], sizes = [8, 256], strides = [1, 1]} : vector<8x324xf32> to vector<8x256xf32>
    %88 = vector.broadcast %86 : vector<1x256xf32> to vector<8x256xf32>
    %89 = arith.mulf %87, %88 : vector<8x256xf32>
    %90 = vector.extract_strided_slice %3 {offsets = [6, 0], sizes = [1, 256], strides = [1, 1]} : vector<9x256xf32> to vector<1x256xf32>
    %91 = vector.extract_strided_slice %65 {offsets = [0, 64], sizes = [8, 256], strides = [1, 1]} : vector<8x324xf32> to vector<8x256xf32>
    %92 = vector.broadcast %90 : vector<1x256xf32> to vector<8x256xf32>
    %93 = arith.mulf %91, %92 : vector<8x256xf32>
    %94 = vector.extract_strided_slice %3 {offsets = [7, 0], sizes = [1, 256], strides = [1, 1]} : vector<9x256xf32> to vector<1x256xf32>
    %95 = vector.extract_strided_slice %65 {offsets = [0, 66], sizes = [8, 256], strides = [1, 1]} : vector<8x324xf32> to vector<8x256xf32>
    %96 = vector.broadcast %94 : vector<1x256xf32> to vector<8x256xf32>
    %97 = arith.mulf %95, %96 : vector<8x256xf32>
    %98 = vector.extract_strided_slice %3 {offsets = [8, 0], sizes = [1, 256], strides = [1, 1]} : vector<9x256xf32> to vector<1x256xf32>
    %99 = vector.extract_strided_slice %65 {offsets = [0, 68], sizes = [8, 256], strides = [1, 1]} : vector<8x324xf32> to vector<8x256xf32>
    %100 = vector.broadcast %98 : vector<1x256xf32> to vector<8x256xf32>
    %101 = arith.mulf %99, %100 : vector<8x256xf32>
    %102 = tpu.concatenate %69, %73, %77, %81, %85, %89, %93, %97, %101 in 0 : vector<8x256xf32>, vector<8x256xf32>, vector<8x256xf32>, vector<8x256xf32>, vector<8x256xf32>, vector<8x256xf32>, vector<8x256xf32>, vector<8x256xf32>, vector<8x256xf32> -> vector<72x256xf32>
    %cst_20 = arith.constant dense<0.000000e+00> : vector<16x256xf32>
    %103 = tpu.matmul %63, %102, %cst_20 {dimension_numbers = #tpu.dot_dimension_numbers<[1], [0], [0], [1], [0, 0, 1, 1], [], []>} : vector<16x72xf32>, vector<72x256xf32>, vector<16x256xf32> -> vector<16x256xf32>
    %c0_21 = arith.constant 0 : index
    %c0_22 = arith.constant 0 : index
    %104 = vector.load %arg8[%c0_21, %c0_22] : memref<16x1xf32, #tpu.memory_space<vmem>>, vector<16x1xf32>
    %105 = vector.broadcast %104 : vector<16x1xf32> to vector<16x256xf32>
    %106 = arith.addf %103, %105 : vector<16x256xf32>
    %cst_23 = arith.constant 0.000000e+00 : f32
    %107 = vector.broadcast %cst_23 : f32 to vector<16x256xf32>
    %108 = arith.maximumf %106, %107 : vector<16x256xf32>
    %109 = vector.extract_strided_slice %4 {offsets = [0, 0], sizes = [1, 256], strides = [1, 1]} : vector<4x256xf32> to vector<1x256xf32>
    %110 = vector.broadcast %109 : vector<1x256xf32> to vector<16x256xf32>
    %111 = arith.mulf %108, %110 : vector<16x256xf32>
    %cst_24 = arith.constant 0.000000e+00 : f32
    %112 = vector.broadcast %cst_24 : f32 to vector<16x1xf32>
    %113 = vector.extract_strided_slice %108 {offsets = [0, 0], sizes = [16, 255], strides = [1, 1]} : vector<16x256xf32> to vector<16x255xf32>
    %114 = tpu.concatenate %112, %113 in 1 : vector<16x1xf32>, vector<16x255xf32> -> vector<16x256xf32>
    %115 = vector.extract_strided_slice %4 {offsets = [1, 0], sizes = [1, 256], strides = [1, 1]} : vector<4x256xf32> to vector<1x256xf32>
    %116 = vector.broadcast %115 : vector<1x256xf32> to vector<16x256xf32>
    %117 = arith.mulf %114, %116 : vector<16x256xf32>
    %118 = arith.addf %111, %117 : vector<16x256xf32>
    %cst_25 = arith.constant 0.000000e+00 : f32
    %119 = vector.broadcast %cst_25 : f32 to vector<16x16xf32>
    %120 = vector.extract_strided_slice %108 {offsets = [0, 0], sizes = [16, 240], strides = [1, 1]} : vector<16x256xf32> to vector<16x240xf32>
    %121 = tpu.concatenate %119, %120 in 1 : vector<16x16xf32>, vector<16x240xf32> -> vector<16x256xf32>
    %122 = vector.extract_strided_slice %4 {offsets = [2, 0], sizes = [1, 256], strides = [1, 1]} : vector<4x256xf32> to vector<1x256xf32>
    %123 = vector.broadcast %122 : vector<1x256xf32> to vector<16x256xf32>
    %124 = arith.mulf %121, %123 : vector<16x256xf32>
    %125 = arith.addf %118, %124 : vector<16x256xf32>
    %cst_26 = arith.constant 0.000000e+00 : f32
    %126 = vector.broadcast %cst_26 : f32 to vector<16x17xf32>
    %127 = vector.extract_strided_slice %108 {offsets = [0, 0], sizes = [16, 239], strides = [1, 1]} : vector<16x256xf32> to vector<16x239xf32>
    %128 = tpu.concatenate %126, %127 in 1 : vector<16x17xf32>, vector<16x239xf32> -> vector<16x256xf32>
    %129 = vector.extract_strided_slice %4 {offsets = [3, 0], sizes = [1, 256], strides = [1, 1]} : vector<4x256xf32> to vector<1x256xf32>
    %130 = vector.broadcast %129 : vector<1x256xf32> to vector<16x256xf32>
    %131 = arith.mulf %128, %130 : vector<16x256xf32>
    %132 = arith.addf %125, %131 : vector<16x256xf32>
    %c0_27 = arith.constant 0 : index
    %c0_28 = arith.constant 0 : index
    %133 = vector.load %arg9[%c0_27, %c0_28] : memref<8x216xf32, #tpu.memory_space<vmem>>, vector<8x216xf32>
    %cst_29 = arith.constant 0.000000e+00 : f32
    %134 = vector.broadcast %cst_29 : f32 to vector<8x17xf32>
    %135 = tpu.concatenate %134, %50, %134 in 1 : vector<8x17xf32>, vector<8x256xf32>, vector<8x17xf32> -> vector<8x290xf32>
    %cst_30 = arith.constant 0.000000e+00 : f32
    %136 = vector.broadcast %cst_30 : f32 to vector<16x17xf32>
    %137 = tpu.concatenate %136, %132, %136 in 1 : vector<16x17xf32>, vector<16x256xf32>, vector<16x17xf32> -> vector<16x290xf32>
    %138 = vector.extract_strided_slice %2 {offsets = [0, 0], sizes = [1, 256], strides = [1, 1]} : vector<9x256xf32> to vector<1x256xf32>
    %139 = vector.extract_strided_slice %135 {offsets = [0, 0], sizes = [8, 256], strides = [1, 1]} : vector<8x290xf32> to vector<8x256xf32>
    %140 = vector.broadcast %138 : vector<1x256xf32> to vector<8x256xf32>
    %141 = arith.mulf %139, %140 : vector<8x256xf32>
    %142 = vector.extract_strided_slice %137 {offsets = [0, 0], sizes = [16, 256], strides = [1, 1]} : vector<16x290xf32> to vector<16x256xf32>
    %143 = vector.broadcast %138 : vector<1x256xf32> to vector<16x256xf32>
    %144 = arith.mulf %142, %143 : vector<16x256xf32>
    %145 = vector.extract_strided_slice %2 {offsets = [1, 0], sizes = [1, 256], strides = [1, 1]} : vector<9x256xf32> to vector<1x256xf32>
    %146 = vector.extract_strided_slice %135 {offsets = [0, 1], sizes = [8, 256], strides = [1, 1]} : vector<8x290xf32> to vector<8x256xf32>
    %147 = vector.broadcast %145 : vector<1x256xf32> to vector<8x256xf32>
    %148 = arith.mulf %146, %147 : vector<8x256xf32>
    %149 = vector.extract_strided_slice %137 {offsets = [0, 1], sizes = [16, 256], strides = [1, 1]} : vector<16x290xf32> to vector<16x256xf32>
    %150 = vector.broadcast %145 : vector<1x256xf32> to vector<16x256xf32>
    %151 = arith.mulf %149, %150 : vector<16x256xf32>
    %152 = vector.extract_strided_slice %2 {offsets = [2, 0], sizes = [1, 256], strides = [1, 1]} : vector<9x256xf32> to vector<1x256xf32>
    %153 = vector.extract_strided_slice %135 {offsets = [0, 2], sizes = [8, 256], strides = [1, 1]} : vector<8x290xf32> to vector<8x256xf32>
    %154 = vector.broadcast %152 : vector<1x256xf32> to vector<8x256xf32>
    %155 = arith.mulf %153, %154 : vector<8x256xf32>
    %156 = vector.extract_strided_slice %137 {offsets = [0, 2], sizes = [16, 256], strides = [1, 1]} : vector<16x290xf32> to vector<16x256xf32>
    %157 = vector.broadcast %152 : vector<1x256xf32> to vector<16x256xf32>
    %158 = arith.mulf %156, %157 : vector<16x256xf32>
    %159 = vector.extract_strided_slice %2 {offsets = [3, 0], sizes = [1, 256], strides = [1, 1]} : vector<9x256xf32> to vector<1x256xf32>
    %160 = vector.extract_strided_slice %135 {offsets = [0, 16], sizes = [8, 256], strides = [1, 1]} : vector<8x290xf32> to vector<8x256xf32>
    %161 = vector.broadcast %159 : vector<1x256xf32> to vector<8x256xf32>
    %162 = arith.mulf %160, %161 : vector<8x256xf32>
    %163 = vector.extract_strided_slice %137 {offsets = [0, 16], sizes = [16, 256], strides = [1, 1]} : vector<16x290xf32> to vector<16x256xf32>
    %164 = vector.broadcast %159 : vector<1x256xf32> to vector<16x256xf32>
    %165 = arith.mulf %163, %164 : vector<16x256xf32>
    %166 = vector.extract_strided_slice %2 {offsets = [4, 0], sizes = [1, 256], strides = [1, 1]} : vector<9x256xf32> to vector<1x256xf32>
    %167 = vector.extract_strided_slice %135 {offsets = [0, 17], sizes = [8, 256], strides = [1, 1]} : vector<8x290xf32> to vector<8x256xf32>
    %168 = vector.broadcast %166 : vector<1x256xf32> to vector<8x256xf32>
    %169 = arith.mulf %167, %168 : vector<8x256xf32>
    %170 = vector.extract_strided_slice %137 {offsets = [0, 17], sizes = [16, 256], strides = [1, 1]} : vector<16x290xf32> to vector<16x256xf32>
    %171 = vector.broadcast %166 : vector<1x256xf32> to vector<16x256xf32>
    %172 = arith.mulf %170, %171 : vector<16x256xf32>
    %173 = vector.extract_strided_slice %2 {offsets = [5, 0], sizes = [1, 256], strides = [1, 1]} : vector<9x256xf32> to vector<1x256xf32>
    %174 = vector.extract_strided_slice %135 {offsets = [0, 18], sizes = [8, 256], strides = [1, 1]} : vector<8x290xf32> to vector<8x256xf32>
    %175 = vector.broadcast %173 : vector<1x256xf32> to vector<8x256xf32>
    %176 = arith.mulf %174, %175 : vector<8x256xf32>
    %177 = vector.extract_strided_slice %137 {offsets = [0, 18], sizes = [16, 256], strides = [1, 1]} : vector<16x290xf32> to vector<16x256xf32>
    %178 = vector.broadcast %173 : vector<1x256xf32> to vector<16x256xf32>
    %179 = arith.mulf %177, %178 : vector<16x256xf32>
    %180 = vector.extract_strided_slice %2 {offsets = [6, 0], sizes = [1, 256], strides = [1, 1]} : vector<9x256xf32> to vector<1x256xf32>
    %181 = vector.extract_strided_slice %135 {offsets = [0, 32], sizes = [8, 256], strides = [1, 1]} : vector<8x290xf32> to vector<8x256xf32>
    %182 = vector.broadcast %180 : vector<1x256xf32> to vector<8x256xf32>
    %183 = arith.mulf %181, %182 : vector<8x256xf32>
    %184 = vector.extract_strided_slice %137 {offsets = [0, 32], sizes = [16, 256], strides = [1, 1]} : vector<16x290xf32> to vector<16x256xf32>
    %185 = vector.broadcast %180 : vector<1x256xf32> to vector<16x256xf32>
    %186 = arith.mulf %184, %185 : vector<16x256xf32>
    %187 = vector.extract_strided_slice %2 {offsets = [7, 0], sizes = [1, 256], strides = [1, 1]} : vector<9x256xf32> to vector<1x256xf32>
    %188 = vector.extract_strided_slice %135 {offsets = [0, 33], sizes = [8, 256], strides = [1, 1]} : vector<8x290xf32> to vector<8x256xf32>
    %189 = vector.broadcast %187 : vector<1x256xf32> to vector<8x256xf32>
    %190 = arith.mulf %188, %189 : vector<8x256xf32>
    %191 = vector.extract_strided_slice %137 {offsets = [0, 33], sizes = [16, 256], strides = [1, 1]} : vector<16x290xf32> to vector<16x256xf32>
    %192 = vector.broadcast %187 : vector<1x256xf32> to vector<16x256xf32>
    %193 = arith.mulf %191, %192 : vector<16x256xf32>
    %194 = vector.extract_strided_slice %2 {offsets = [8, 0], sizes = [1, 256], strides = [1, 1]} : vector<9x256xf32> to vector<1x256xf32>
    %195 = vector.extract_strided_slice %135 {offsets = [0, 34], sizes = [8, 256], strides = [1, 1]} : vector<8x290xf32> to vector<8x256xf32>
    %196 = vector.broadcast %194 : vector<1x256xf32> to vector<8x256xf32>
    %197 = arith.mulf %195, %196 : vector<8x256xf32>
    %198 = vector.extract_strided_slice %137 {offsets = [0, 34], sizes = [16, 256], strides = [1, 1]} : vector<16x290xf32> to vector<16x256xf32>
    %199 = vector.broadcast %194 : vector<1x256xf32> to vector<16x256xf32>
    %200 = arith.mulf %198, %199 : vector<16x256xf32>
    %201 = tpu.concatenate %141, %144, %148, %151, %155, %158, %162, %165, %169, %172, %176, %179, %183, %186, %190, %193 in 0 : vector<8x256xf32>, vector<16x256xf32>, vector<8x256xf32>, vector<16x256xf32>, vector<8x256xf32>, vector<16x256xf32>, vector<8x256xf32>, vector<16x256xf32>, vector<8x256xf32>, vector<16x256xf32>, vector<8x256xf32>, vector<16x256xf32>, vector<8x256xf32>, vector<16x256xf32>, vector<8x256xf32>, vector<16x256xf32> -> vector<192x256xf32>
    %202 = tpu.concatenate %197, %200 in 0 : vector<8x256xf32>, vector<16x256xf32> -> vector<24x256xf32>
    %203 = tpu.concatenate %201, %202 in 0 : vector<192x256xf32>, vector<24x256xf32> -> vector<216x256xf32>
    %cst_31 = arith.constant dense<0.000000e+00> : vector<8x256xf32>
    %204 = tpu.matmul %133, %203, %cst_31 {dimension_numbers = #tpu.dot_dimension_numbers<[1], [0], [0], [1], [0, 0, 1, 1], [], []>} : vector<8x216xf32>, vector<216x256xf32>, vector<8x256xf32> -> vector<8x256xf32>
    %c0_32 = arith.constant 0 : index
    %c0_33 = arith.constant 0 : index
    %205 = vector.load %arg10[%c0_32, %c0_33] : memref<8x1xf32, #tpu.memory_space<vmem>>, vector<8x1xf32>
    %206 = vector.broadcast %205 : vector<8x1xf32> to vector<8x256xf32>
    %207 = arith.addf %204, %206 : vector<8x256xf32>
    %cst_34 = arith.constant 0.000000e+00 : f32
    %208 = vector.broadcast %cst_34 : f32 to vector<8x256xf32>
    %209 = arith.maximumf %207, %208 : vector<8x256xf32>
    %c0_35 = arith.constant 0 : index
    %c0_36 = arith.constant 0 : index
    %210 = vector.load %arg11[%c0_35, %c0_36] : memref<3x8xf32, #tpu.memory_space<vmem>>, vector<3x8xf32>
    %cst_37 = arith.constant dense<0.000000e+00> : vector<3x256xf32>
    %211 = tpu.matmul %210, %209, %cst_37 {dimension_numbers = #tpu.dot_dimension_numbers<[1], [0], [0], [1], [0, 0, 1, 1], [], []>} : vector<3x8xf32>, vector<8x256xf32>, vector<3x256xf32> -> vector<3x256xf32>
    %c0_38 = arith.constant 0 : index
    %c0_39 = arith.constant 0 : index
    %212 = vector.load %arg12[%c0_38, %c0_39] : memref<3x1xf32, #tpu.memory_space<vmem>>, vector<3x1xf32>
    %213 = vector.broadcast %212 : vector<3x1xf32> to vector<3x256xf32>
    %214 = arith.addf %211, %213 : vector<3x256xf32>
    %c0_40 = arith.constant 0 : index
    %c0_41 = arith.constant 0 : index
    %c0_42 = arith.constant 0 : index
    %215 = vector.load %arg13[%c0_40, %c0_41, %c0_42] : memref<1x3x256xf32, #tpu.memory_space<vmem>>, vector<1x3x256xf32>
    %216 = vector.shape_cast %215 : vector<1x3x256xf32> to vector<3x256xf32>
    %217 = vector.shape_cast %214 : vector<3x256xf32> to vector<1x3x256xf32>
    tpu.vector_store %arg13[%c0_40, %c0_41, %c0_42], %217 {strides = array<i32>} : memref<1x3x256xf32, #tpu.memory_space<vmem>>, vector<1x3x256xf32>,
    return
  }
  func.func @transform_0(%arg0: i32) -> (i32, i32, i32) {
    %c0_i32 = arith.constant 0 : i32
    %c0_i32_0 = arith.constant 0 : i32
    %c0_i32_1 = arith.constant 0 : i32
    return %arg0, %c0_i32, %c0_i32_0 : i32, i32, i32
  }
  func.func @transform_1(%arg0: i32) -> (i32, i32) {
    %c0_i32 = arith.constant 0 : i32
    %c0_i32_0 = arith.constant 0 : i32
    %c0_i32_1 = arith.constant 0 : i32
    return %c0_i32, %c0_i32_0 : i32, i32
  }
  func.func @transform_2(%arg0: i32) -> (i32, i32) {
    %c0_i32 = arith.constant 0 : i32
    %c0_i32_0 = arith.constant 0 : i32
    %c0_i32_1 = arith.constant 0 : i32
    return %c0_i32, %c0_i32_0 : i32, i32
  }
  func.func @transform_3(%arg0: i32) -> (i32, i32) {
    %c0_i32 = arith.constant 0 : i32
    %c0_i32_0 = arith.constant 0 : i32
    %c0_i32_1 = arith.constant 0 : i32
    return %c0_i32, %c0_i32_0 : i32, i32
  }
  func.func @transform_4(%arg0: i32) -> (i32, i32) {
    %c0_i32 = arith.constant 0 : i32
    %c0_i32_0 = arith.constant 0 : i32
    %c0_i32_1 = arith.constant 0 : i32
    return %c0_i32, %c0_i32_0 : i32, i32
  }
  func.func @transform_5(%arg0: i32) -> (i32, i32) {
    %c0_i32 = arith.constant 0 : i32
    %c0_i32_0 = arith.constant 0 : i32
    %c0_i32_1 = arith.constant 0 : i32
    return %c0_i32, %c0_i32_0 : i32, i32
  }
  func.func @transform_6(%arg0: i32) -> (i32, i32) {
    %c0_i32 = arith.constant 0 : i32
    %c0_i32_0 = arith.constant 0 : i32
    %c0_i32_1 = arith.constant 0 : i32
    return %c0_i32, %c0_i32_0 : i32, i32
  }
  func.func @transform_7(%arg0: i32) -> (i32, i32) {
    %c0_i32 = arith.constant 0 : i32
    %c0_i32_0 = arith.constant 0 : i32
    %c0_i32_1 = arith.constant 0 : i32
    return %c0_i32, %c0_i32_0 : i32, i32
  }
  func.func @transform_8(%arg0: i32) -> (i32, i32) {
    %c0_i32 = arith.constant 0 : i32
    %c0_i32_0 = arith.constant 0 : i32
    %c0_i32_1 = arith.constant 0 : i32
    return %c0_i32, %c0_i32_0 : i32, i32
  }
  func.func @transform_9(%arg0: i32) -> (i32, i32) {
    %c0_i32 = arith.constant 0 : i32
    %c0_i32_0 = arith.constant 0 : i32
    %c0_i32_1 = arith.constant 0 : i32
    return %c0_i32, %c0_i32_0 : i32, i32
  }
  func.func @transform_10(%arg0: i32) -> (i32, i32) {
    %c0_i32 = arith.constant 0 : i32
    %c0_i32_0 = arith.constant 0 : i32
    %c0_i32_1 = arith.constant 0 : i32
    return %c0_i32, %c0_i32_0 : i32, i32
  }
  func.func @transform_11(%arg0: i32) -> (i32, i32) {
    %c0_i32 = arith.constant 0 : i32
    %c0_i32_0 = arith.constant 0 : i32
    %c0_i32_1 = arith.constant 0 : i32
    return %c0_i32, %c0_i32_0 : i32, i32
  }
  func.func @transform_12(%arg0: i32) -> (i32, i32, i32) {
    %c0_i32 = arith.constant 0 : i32
    %c0_i32_0 = arith.constant 0 : i32
    %c0_i32_1 = arith.constant 0 : i32
    return %arg0, %c0_i32, %c0_i32_0 : i32, i32, i32
  }
}

</mosaic_0001>

<llo_original>
// kernel: full_model_single.1
$region0: #{full_model_single.1}
  #allocation0 [shape = 'u32[]', space=smem, size = 0x4, offset = 0x4, fixed_abs, tag = 'smem constant byte address 0x4 - core index']
  #allocation1 [shape = 'u32[72,128]{1,0:T(1,128)}', space=vmem, size = 0x9000, scoped, tag = 'internal scratch']
  %s0 = inlined_call_operand.vmem [shape: f32[2,4,256], index: 0, kind: input, shape index: {}]
  %s1 = inlined_call_operand.vmem [shape: f32[9,256], index: 1, kind: input, shape index: {}]
  %s2 = inlined_call_operand.vmem [shape: f32[9,256], index: 2, kind: input, shape index: {}]
  %s3 = inlined_call_operand.vmem [shape: f32[4,256], index: 3, kind: input, shape index: {}]
  %s4 = inlined_call_operand.vmem [shape: f32[8,36], index: 4, kind: input, shape index: {}]
  %s5 = inlined_call_operand.vmem [shape: f32[8,1], index: 5, kind: input, shape index: {}]
  %s6 = inlined_call_operand.vmem [shape: f32[16,72], index: 6, kind: input, shape index: {}]
  %s7 = inlined_call_operand.vmem [shape: f32[16,1], index: 7, kind: input, shape index: {}]
  %s8 = inlined_call_operand.vmem [shape: f32[8,216], index: 8, kind: input, shape index: {}]
  %s9 = inlined_call_operand.vmem [shape: f32[8,1], index: 9, kind: input, shape index: {}]
  %s10 = inlined_call_operand.vmem [shape: f32[3,8], index: 10, kind: input, shape index: {}]
  %s11 = inlined_call_operand.vmem [shape: f32[3,1], index: 11, kind: input, shape index: {}]
  %s12 = inlined_call_operand.vmem [shape: f32[2,3,256], index: 12, kind: output, shape index: {}]
  %s13 = sld [smem:[#allocation0]]
  $region81: #{full_model_single.1} parent=0
    _
  %s15 = ssub.s32 1, %s13
  %s16 = scalar_select 0, %s15, %s13
  loop: start=0, step=1, limit=4
  $region2: #{full_model_single.1} parent=0 // loop_pre_header
    _
  $region3: #{full_model_single.1} parent=0 // loop_header
    %s18 = sphi 0, %s22
    %p19 = scmp.ge.s32.totalorder %s18, 4
    %s28 = sphi 0, %s30
    %s31 = sphi 0, %s28
    %s32 = sphi 0, %s31
    %s48 = sphi 0, %s32
    %s52 = sphi 0, %s52
    %s54 = sphi 0, %s52
    %s55 = sphi 0, %s54
    %s69 = sphi 0, %s55
    %s73 = sphi 0, %s73
    %s75 = sphi 0, %s73
    %s76 = sphi 0, %s75
    %s90 = sphi 0, %s76
    %s94 = sphi 0, %s94
    %s96 = sphi 0, %s94
    %s97 = sphi 0, %s96
    %s111 = sphi 0, %s97
    %s115 = sphi 0, %s115
    %s117 = sphi 0, %s115
    %s118 = sphi 0, %s117
    %s132 = sphi 0, %s118
    %s136 = sphi 0, %s136
    %s138 = sphi 0, %s136
    %s139 = sphi 0, %s138
    %s153 = sphi 0, %s139
    %s157 = sphi 0, %s157
    %s159 = sphi 0, %s157
    %s160 = sphi 0, %s159
    %s174 = sphi 0, %s160
    %s178 = sphi 0, %s178
    %s180 = sphi 0, %s178
    %s181 = sphi 0, %s180
    %s195 = sphi 0, %s181
    %s199 = sphi 0, %s199
    %s201 = sphi 0, %s199
    %s202 = sphi 0, %s201
    %s216 = sphi 0, %s202
    %s220 = sphi 0, %s220
    %s222 = sphi 0, %s220
    %s223 = sphi 0, %s222
    %s237 = sphi 0, %s223
    %s241 = sphi 0, %s241
    %s243 = sphi 0, %s241
    %s244 = sphi 0, %s243
    %s258 = sphi 0, %s244
    %s262 = sphi 0, %s262
    %s264 = sphi 0, %s262
    %s265 = sphi 0, %s264
    %s279 = sphi 0, %s265
    %s285 = sphi 0, %s287
    %s288 = sphi 0, %s285
    %s289 = sphi 0, %s288
    %s305 = sphi 0, %s289
  $region4: #{full_model_single.1} parent=0 // loop_header_branch
    %21 = sbr.rel (%p19) target = $region8
  $region5: #{full_model_single.1} parent=0 // loop_body
    %s23 = ssub.s32 %s18, 1
    %s24 = ssub.s32 %s18, 2
    %s25 = sadd.s32 %s18, 1
    %s26 = ssub.s32 %s18, %s25
    %p27 = scmp.eq.s32.totalorder %s26, 0
    %s29 = sadd.s32 %s28, 1
    %s30 = scalar_select %p27, %s28, %s29
    %p33 = pneg %p27
    %p34 = scmp.eq.s32.totalorder %s18, 1
    %p35 = por %p33, %p34
    %p36 = scmp.ne.s32.totalorder %s28, %s31
    %p37 = scmp.eq.s32.totalorder %s18, 0
    %p38 = por %p36, %p37
    %p39 = scmp.ne.s32.totalorder %s28, %s31
    %p40 = scmp.eq.s32.totalorder %s23, 1
    %p41 = por %p39, %p40
    %p42 = scmp.ne.s32.totalorder %s31, %s32
    %p43 = scmp.eq.s32.totalorder %s23, 0
    %p44 = por %p42, %p43
    %p45 = scmp.ne.s32.totalorder %s31, %s32
    %p46 = scmp.eq.s32.totalorder %s24, 1
    %p47 = por %p45, %p46
    %p49 = scmp.ne.s32.totalorder %s32, %s48
    %p50 = scmp.eq.s32.totalorder %s24, 0
    %p51 = por %p49, %p50
    %s53 = sadd.s32 %s52, 1
    %p56 = scmp.eq.s32.totalorder %s18, 1
    %p57 = scmp.ne.s32.totalorder %s52, %s54
    %p58 = scmp.eq.s32.totalorder %s18, 0
    %p59 = por %p57, %p58
    %p60 = scmp.ne.s32.totalorder %s52, %s54
    %p61 = scmp.eq.s32.totalorder %s23, 1
    %p62 = por %p60, %p61
    %p63 = scmp.ne.s32.totalorder %s54, %s55
    %p64 = scmp.eq.s32.totalorder %s23, 0
    %p65 = por %p63, %p64
    %p66 = scmp.ne.s32.totalorder %s54, %s55
    %p67 = scmp.eq.s32.totalorder %s24, 1
    %p68 = por %p66, %p67
    %p70 = scmp.ne.s32.totalorder %s55, %s69
    %p71 = scmp.eq.s32.totalorder %s24, 0
    %p72 = por %p70, %p71
    %s74 = sadd.s32 %s73, 1
    %p77 = scmp.eq.s32.totalorder %s18, 1
    %p78 = scmp.ne.s32.totalorder %s73, %s75
    %p79 = scmp.eq.s32.totalorder %s18, 0
    %p80 = por %p78, %p79
    %p81 = scmp.ne.s32.totalorder %s73, %s75
    %p82 = scmp.eq.s32.totalorder %s23, 1
    %p83 = por %p81, %p82
    %p84 = scmp.ne.s32.totalorder %s75, %s76
    %p85 = scmp.eq.s32.totalorder %s23, 0
    %p86 = por %p84, %p85
    %p87 = scmp.ne.s32.totalorder %s75, %s76
    %p88 = scmp.eq.s32.totalorder %s24, 1
    %p89 = por %p87, %p88
    %p91 = scmp.ne.s32.totalorder %s76, %s90
    %p92 = scmp.eq.s32.totalorder %s24, 0
    %p93 = por %p91, %p92
    %s95 = sadd.s32 %s94, 1
    %p98 = scmp.eq.s32.totalorder %s18, 1
    %p99 = scmp.ne.s32.totalorder %s94, %s96
    %p100 = scmp.eq.s32.totalorder %s18, 0
    %p101 = por %p99, %p100
    %p102 = scmp.ne.s32.totalorder %s94, %s96
    %p103 = scmp.eq.s32.totalorder %s23, 1
    %p104 = por %p102, %p103
    %p105 = scmp.ne.s32.totalorder %s96, %s97
    %p106 = scmp.eq.s32.totalorder %s23, 0
    %p107 = por %p105, %p106
    %p108 = scmp.ne.s32.totalorder %s96, %s97
    %p109 = scmp.eq.s32.totalorder %s24, 1
    %p110 = por %p108, %p109
    %p112 = scmp.ne.s32.totalorder %s97, %s111
    %p113 = scmp.eq.s32.totalorder %s24, 0
    %p114 = por %p112, %p113
    %s116 = sadd.s32 %s115, 1
    %p119 = scmp.eq.s32.totalorder %s18, 1
    %p120 = scmp.ne.s32.totalorder %s115, %s117
    %p121 = scmp.eq.s32.totalorder %s18, 0
    %p122 = por %p120, %p121
    %p123 = scmp.ne.s32.totalorder %s115, %s117
    %p124 = scmp.eq.s32.totalorder %s23, 1
    %p125 = por %p123, %p124
    %p126 = scmp.ne.s32.totalorder %s117, %s118
    %p127 = scmp.eq.s32.totalorder %s23, 0
    %p128 = por %p126, %p127
    %p129 = scmp.ne.s32.totalorder %s117, %s118
    %p130 = scmp.eq.s32.totalorder %s24, 1
    %p131 = por %p129, %p130
    %p133 = scmp.ne.s32.totalorder %s118, %s132
    %p134 = scmp.eq.s32.totalorder %s24, 0
    %p135 = por %p133, %p134
    %s137 = sadd.s32 %s136, 1
    %p140 = scmp.eq.s32.totalorder %s18, 1
    %p141 = scmp.ne.s32.totalorder %s136, %s138
    %p142 = scmp.eq.s32.totalorder %s18, 0
    %p143 = por %p141, %p142
    %p144 = scmp.ne.s32.totalorder %s136, %s138
    %p145 = scmp.eq.s32.totalorder %s23, 1
    %p146 = por %p144, %p145
    %p147 = scmp.ne.s32.totalorder %s138, %s139
    %p148 = scmp.eq.s32.totalorder %s23, 0
    %p149 = por %p147, %p148
    %p150 = scmp.ne.s32.totalorder %s138, %s139
    %p151 = scmp.eq.s32.totalorder %s24, 1
    %p152 = por %p150, %p151
    %p154 = scmp.ne.s32.totalorder %s139, %s153
    %p155 = scmp.eq.s32.totalorder %s24, 0
    %p156 = por %p154, %p155
    %s158 = sadd.s32 %s157, 1
    %p161 = scmp.eq.s32.totalorder %s18, 1
    %p162 = scmp.ne.s32.totalorder %s157, %s159
    %p163 = scmp.eq.s32.totalorder %s18, 0
    %p164 = por %p162, %p163
    %p165 = scmp.ne.s32.totalorder %s157, %s159
    %p166 = scmp.eq.s32.totalorder %s23, 1
    %p167 = por %p165, %p166
    %p168 = scmp.ne.s32.totalorder %s159, %s160
    %p169 = scmp.eq.s32.totalorder %s23, 0
    %p170 = por %p168, %p169
    %p171 = scmp.ne.s32.totalorder %s159, %s160
    %p172 = scmp.eq.s32.totalorder %s24, 1
    %p173 = por %p171, %p172
    %p175 = scmp.ne.s32.totalorder %s160, %s174
    %p176 = scmp.eq.s32.totalorder %s24, 0
    %p177 = por %p175, %p176
    %s179 = sadd.s32 %s178, 1
    %p182 = scmp.eq.s32.totalorder %s18, 1
    %p183 = scmp.ne.s32.totalorder %s178, %s180
    %p184 = scmp.eq.s32.totalorder %s18, 0
    %p185 = por %p183, %p184
    %p186 = scmp.ne.s32.totalorder %s178, %s180
    %p187 = scmp.eq.s32.totalorder %s23, 1
    %p188 = por %p186, %p187
    %p189 = scmp.ne.s32.totalorder %s180, %s181
    %p190 = scmp.eq.s32.totalorder %s23, 0
    %p191 = por %p189, %p190
    %p192 = scmp.ne.s32.totalorder %s180, %s181
    %p193 = scmp.eq.s32.totalorder %s24, 1
    %p194 = por %p192, %p193
    %p196 = scmp.ne.s32.totalorder %s181, %s195
    %p197 = scmp.eq.s32.totalorder %s24, 0
    %p198 = por %p196, %p197
    %s200 = sadd.s32 %s199, 1
    %p203 = scmp.eq.s32.totalorder %s18, 1
    %p204 = scmp.ne.s32.totalorder %s199, %s201
    %p205 = scmp.eq.s32.totalorder %s18, 0
    %p206 = por %p204, %p205
    %p207 = scmp.ne.s32.totalorder %s199, %s201
    %p208 = scmp.eq.s32.totalorder %s23, 1
    %p209 = por %p207, %p208
    %p210 = scmp.ne.s32.totalorder %s201, %s202
    %p211 = scmp.eq.s32.totalorder %s23, 0
    %p212 = por %p210, %p211
    %p213 = scmp.ne.s32.totalorder %s201, %s202
    %p214 = scmp.eq.s32.totalorder %s24, 1
    %p215 = por %p213, %p214
    %p217 = scmp.ne.s32.totalorder %s202, %s216
    %p218 = scmp.eq.s32.totalorder %s24, 0
    %p219 = por %p217, %p218
    %s221 = sadd.s32 %s220, 1
    %p224 = scmp.eq.s32.totalorder %s18, 1
    %p225 = scmp.ne.s32.totalorder %s220, %s222
    %p226 = scmp.eq.s32.totalorder %s18, 0
    %p227 = por %p225, %p226
    %p228 = scmp.ne.s32.totalorder %s220, %s222
    %p229 = scmp.eq.s32.totalorder %s23, 1
    %p230 = por %p228, %p229
    %p231 = scmp.ne.s32.totalorder %s222, %s223
    %p232 = scmp.eq.s32.totalorder %s23, 0
    %p233 = por %p231, %p232
    %p234 = scmp.ne.s32.totalorder %s222, %s223
    %p235 = scmp.eq.s32.totalorder %s24, 1
    %p236 = por %p234, %p235
    %p238 = scmp.ne.s32.totalorder %s223, %s237
    %p239 = scmp.eq.s32.totalorder %s24, 0
    %p240 = por %p238, %p239
    %s242 = sadd.s32 %s241, 1
    %p245 = scmp.eq.s32.totalorder %s18, 1
    %p246 = scmp.ne.s32.totalorder %s241, %s243
    %p247 = scmp.eq.s32.totalorder %s18, 0
    %p248 = por %p246, %p247
    %p249 = scmp.ne.s32.totalorder %s241, %s243
    %p250 = scmp.eq.s32.totalorder %s23, 1
    %p251 = por %p249, %p250
    %p252 = scmp.ne.s32.totalorder %s243, %s244
    %p253 = scmp.eq.s32.totalorder %s23, 0
    %p254 = por %p252, %p253
    %p255 = scmp.ne.s32.totalorder %s243, %s244
    %p256 = scmp.eq.s32.totalorder %s24, 1
    %p257 = por %p255, %p256
    %p259 = scmp.ne.s32.totalorder %s244, %s258
    %p260 = scmp.eq.s32.totalorder %s24, 0
    %p261 = por %p259, %p260
    %s263 = sadd.s32 %s262, 1
    %p266 = scmp.eq.s32.totalorder %s18, 1
    %p267 = scmp.ne.s32.totalorder %s262, %s264
    %p268 = scmp.eq.s32.totalorder %s18, 0
    %p269 = por %p267, %p268
    %p270 = scmp.ne.s32.totalorder %s262, %s264
    %p271 = scmp.eq.s32.totalorder %s23, 1
    %p272 = por %p270, %p271
    %p273 = scmp.ne.s32.totalorder %s264, %s265
    %p274 = scmp.eq.s32.totalorder %s23, 0
    %p275 = por %p273, %p274
    %p276 = scmp.ne.s32.totalorder %s264, %s265
    %p277 = scmp.eq.s32.totalorder %s24, 1
    %p278 = por %p276, %p277
    %p280 = scmp.ne.s32.totalorder %s265, %s279
    %p281 = scmp.eq.s32.totalorder %s24, 0
    %p282 = por %p280, %p281
    %s283 = ssub.s32 %s18, %s25
    %p284 = scmp.eq.s32.totalorder %s283, 0
    %s286 = sadd.s32 %s285, 1
    %s287 = scalar_select %p284, %s285, %s286
    %p290 = pneg %p284
    %p291 = scmp.eq.s32.totalorder %s18, 1
    %p292 = por %p290, %p291
    %p293 = scmp.ne.s32.totalorder %s285, %s288
    %p294 = scmp.eq.s32.totalorder %s18, 0
    %p295 = por %p293, %p294
    %p296 = scmp.ne.s32.totalorder %s285, %s288
    %p297 = scmp.eq.s32.totalorder %s23, 1
    %p298 = por %p296, %p297
    %p299 = scmp.ne.s32.totalorder %s288, %s289
    %p300 = scmp.eq.s32.totalorder %s23, 0
    %p301 = por %p299, %p300
    %p302 = scmp.ne.s32.totalorder %s288, %s289
    %p303 = scmp.eq.s32.totalorder %s24, 1
    %p304 = por %p302, %p303
    %p306 = scmp.ne.s32.totalorder %s289, %s305
    %p307 = scmp.eq.s32.totalorder %s24, 0
    %p308 = por %p306, %p307
    %p309 = scmp.le.s32.totalorder 1, %s18
    %p310 = scmp.lt.s32.totalorder %s18, 3
    %p311 = pnand %p309, %p310
    %p312 = pneg %p311
    // Predicated region
    $region9: #{full_model_single.1} parent=5 // pred_check
      _
    $region10: #{full_model_single.1} parent=5 // pred_check_branch
      %314 = sbr.rel (%p311) target = $region12
    $region11: #{full_model_single.1} parent=5 // pred_region
      %s315 = ssub.s32 %s18, 1
      // Predicated region
      $region13: #{full_model_single.1} parent=11 // pred_check
        %p316 = pneg %p65
      $region14: #{full_model_single.1} parent=11 // pred_check_branch
        %318 = sbr.rel (%p316) target = $region16
      $region15: #{full_model_single.1} parent=11 // pred_region
        _
      $region16: #{full_model_single.1} parent=11 // pred_fallthru
        _
      // Predicated region
      $region17: #{full_model_single.1} parent=11 // pred_check
        %p319 = pneg %p86
      $region18: #{full_model_single.1} parent=11 // pred_check_branch
        %321 = sbr.rel (%p319) target = $region20
      $region19: #{full_model_single.1} parent=11 // pred_region
        _
      $region20: #{full_model_single.1} parent=11 // pred_fallthru
        _
      // Predicated region
      $region21: #{full_model_single.1} parent=11 // pred_check
        %p322 = pneg %p107
      $region22: #{full_model_single.1} parent=11 // pred_check_branch
        %324 = sbr.rel (%p322) target = $region24
      $region23: #{full_model_single.1} parent=11 // pred_region
        _
      $region24: #{full_model_single.1} parent=11 // pred_fallthru
        _
      // Predicated region
      $region25: #{full_model_single.1} parent=11 // pred_check
        %p325 = pneg %p128
      $region26: #{full_model_single.1} parent=11 // pred_check_branch
        %327 = sbr.rel (%p325) target = $region28
      $region27: #{full_model_single.1} parent=11 // pred_region
        _
      $region28: #{full_model_single.1} parent=11 // pred_fallthru
        _
      // Predicated region
      $region29: #{full_model_single.1} parent=11 // pred_check
        %p328 = pneg %p149
      $region30: #{full_model_single.1} parent=11 // pred_check_branch
        %330 = sbr.rel (%p328) target = $region32
      $region31: #{full_model_single.1} parent=11 // pred_region
        _
      $region32: #{full_model_single.1} parent=11 // pred_fallthru
        _
      // Predicated region
      $region33: #{full_model_single.1} parent=11 // pred_check
        %p331 = pneg %p170
      $region34: #{full_model_single.1} parent=11 // pred_check_branch
        %333 = sbr.rel (%p331) target = $region36
      $region35: #{full_model_single.1} parent=11 // pred_region
        _
      $region36: #{full_model_single.1} parent=11 // pred_fallthru
        _
      // Predicated region
      $region37: #{full_model_single.1} parent=11 // pred_check
        %p334 = pneg %p191
      $region38: #{full_model_single.1} parent=11 // pred_check_branch
        %336 = sbr.rel (%p334) target = $region40
      $region39: #{full_model_single.1} parent=11 // pred_region
        _
      $region40: #{full_model_single.1} parent=11 // pred_fallthru
        _
      // Predicated region
      $region41: #{full_model_single.1} parent=11 // pred_check
        %p337 = pneg %p212
      $region42: #{full_model_single.1} parent=11 // pred_check_branch
        %339 = sbr.rel (%p337) target = $region44
      $region43: #{full_model_single.1} parent=11 // pred_region
        _
      $region44: #{full_model_single.1} parent=11 // pred_fallthru
        _
      // Predicated region
      $region45: #{full_model_single.1} parent=11 // pred_check
        %p340 = pneg %p233
      $region46: #{full_model_single.1} parent=11 // pred_check_branch
        %342 = sbr.rel (%p340) target = $region48
      $region47: #{full_model_single.1} parent=11 // pred_region
        _
      $region48: #{full_model_single.1} parent=11 // pred_fallthru
        _
      // Predicated region
      $region49: #{full_model_single.1} parent=11 // pred_check
        %p343 = pneg %p254
      $region50: #{full_model_single.1} parent=11 // pred_check_branch
        %345 = sbr.rel (%p343) target = $region52
      $region51: #{full_model_single.1} parent=11 // pred_region
        _
      $region52: #{full_model_single.1} parent=11 // pred_fallthru
        _
      // Predicated region
      $region53: #{full_model_single.1} parent=11 // pred_check
        %p346 = pneg %p275
      $region54: #{full_model_single.1} parent=11 // pred_check_branch
        %348 = sbr.rel (%p346) target = $region56
      $region55: #{full_model_single.1} parent=11 // pred_region
        _
      $region56: #{full_model_single.1} parent=11 // pred_fallthru
        _
    $region12: #{full_model_single.1} parent=5 // pred_fallthru
      _
    %p349 = scmp.lt.s32.totalorder %s18, 2
    // Predicated region
    $region57: #{full_model_single.1} parent=5 // pred_check
      %p350 = pneg %p349
    $region58: #{full_model_single.1} parent=5 // pred_check_branch
      %352 = sbr.rel (%p350) target = $region60
    $region59: #{full_model_single.1} parent=5 // pred_region
      // Predicated region
      $region61: #{full_model_single.1} parent=59 // pred_check
        %p353 = pneg %p38
      $region62: #{full_model_single.1} parent=59 // pred_check_branch
        %355 = sbr.rel (%p353) target = $region64
      $region63: #{full_model_single.1} parent=59 // pred_region
        %p356 = scmp.lt.s32.totalorder %s18, 1
        %s357 = scalar_select %p356, %s18, 1
        %s358 = smul.addr %s357, 2
        %s359 = smul.addr %s358, 4
        %s360 = scalar_lea.vmem %s0, %s359
      $region64: #{full_model_single.1} parent=59 // pred_fallthru
        _
    $region60: #{full_model_single.1} parent=5 // pred_fallthru
      _
    %p361 = scmp.le.s32.totalorder 1, %s18
    %p362 = scmp.lt.s32.totalorder %s18, 3
    %p363 = pnand %p361, %p362
    %p364 = pneg %p363
    // Predicated region
    $region65: #{full_model_single.1} parent=5 // pred_check
      _
    $region66: #{full_model_single.1} parent=5 // pred_check_branch
      %366 = sbr.rel (%p363) target = $region68
    $region67: #{full_model_single.1} parent=5 // pred_region
      %s367 = ssub.s32 %s18, 1
      %p368 = scmp.lt.s32.totalorder %s23, 1
      %s369 = scalar_select %p368, %s23, 1
      %s370 = smul.addr %s369, 2
      %s371 = smul.addr %s370, 4
      %s372 = scalar_lea.vmem %s0, %s371
      %p373 = pneg %p44
      %p374 = pneg %p41
      %p375 = pneg %p65
      %p376 = pneg %p62
      %p377 = pneg %p86
      %p378 = pneg %p83
      %p379 = pneg %p107
      %p380 = pneg %p104
      %p381 = pneg %p128
      %p382 = pneg %p125
      %p383 = pneg %p149
      %p384 = pneg %p146
      %p385 = pneg %p170
      %p386 = pneg %p167
      %p387 = pneg %p191
      %p388 = pneg %p188
      %p389 = pneg %p212
      %p390 = pneg %p209
      %p391 = pneg %p233
      %p392 = pneg %p230
      %p393 = pneg %p254
      %p394 = pneg %p251
      %p395 = pneg %p275
      %p396 = pneg %p272
      %p397 = pneg %p301
      %p398 = pneg %p298
      %p399 = scmp.lt.s32.totalorder %s23, 1
      %s400 = scalar_select %p399, %s23, 1
      %s401 = smul.addr %s400, 2
      %s402 = smul.addr %s401, 4
      %s403 = scalar_lea.vmem %s12, %s402
      %p404 = scmp.lt.s32.totalorder %s23, 1
      %s405 = scalar_select %p404, %s23, 1
      %s406 = smul.addr %s405, 2
      %s407 = smul.addr %s406, 4
      %s408 = scalar_lea.vmem %s0, %s407
      %p409 = scmp.lt.s32.totalorder %s23, 1
      %s410 = scalar_select %p409, %s23, 1
      %s411 = smul.addr %s410, 2
      %s412 = smul.addr %s411, 4
      %s413 = scalar_lea.vmem %s12, %s412
      %v414 = vld [vmem:[%s408] sm:$0xff]
      %v415 = vld [vmem:[%s1] sm:$0xff]
      %v416 = vld [vmem:[%s1 + $0x8] sm:$0xff]
      %v417 = vld [vmem:[%s1 + $0x10] sm:$0x1]
      %v418 = vld [vmem:[%s1 + $0x18] sm:$0x1]
      %v419 = vld [vmem:[%s2] sm:$0xff]
      %v420 = vld [vmem:[%s2 + $0x8] sm:$0xff]
      %v421 = vld [vmem:[%s2 + $0x10] sm:$0x1]
      %v422 = vld [vmem:[%s2 + $0x18] sm:$0x1]
      %v423 = vld [vmem:[%s3] sm:$0xff]
      %v424 = vld [vmem:[%s4] sm:$0xff]
      %426 = vst [vmem:[#allocation1] ss:$2 sm:$0xff] %v414
      %v427 = vld.sshfl [vmem:[#allocation1] sm:$0xff pattern:$0x75316420]
      %v428 = vld.sshfl [vmem:[#allocation1 + $0x8] sm:$0xff pattern:$0x75316420]
      %429 = vrot.lane.b32.xlu0 %v427, 17
      %v430 = vpop.permute.xlu0 %429
      %431 = vrot.lane.b32.xlu0 %v428, 17
      %v432 = vpop.permute.xlu0 %431
      %vm433 = vcmask 138240
      %v434 = vsel %vm433, %v430, %v432
      %v438 = vsel %vm433, 0.0, %v430
      %v439 = vsel %vm433, %v432, 0.0
      %v440 = vperm.slane %v415, 0
      %v441 = vperm.slane %v416, 0
      %v442 = vmul.f32 %v438, %v440
      %v443 = vmul.f32 %v434, %v441
      %v444 = vperm.slane %v415, 1
      %v445 = vperm.slane %v416, 1
      %448 = vrot.lane.b32.xlu0 %v444, 1
      %v449 = vpop.permute.xlu0 %448
      %450 = vrot.lane.b32.xlu0 %v445, 1
      %v451 = vpop.permute.xlu0 %450
      %vm452 = vcmask 7168
      %v453 = vsel %vm452, %v449, %v451
      %v457 = vmul.f32 %v438, %v449
      %v458 = vmul.f32 %v434, %v453
      %v459 = vmul.f32 %v439, %v451
      %v460 = vperm.slane %v415, 2
      %v461 = vperm.slane %v416, 2
      %464 = vrot.lane.b32.xlu0 %v460, 2
      %v465 = vpop.permute.xlu0 %464
      %466 = vrot.lane.b32.xlu0 %v461, 2
      %v467 = vpop.permute.xlu0 %466
      %vm468 = vcmask 15360
      %v469 = vsel %vm468, %v465, %v467
      %v473 = vmul.f32 %v438, %v465
      %v474 = vmul.f32 %v434, %v469
      %v475 = vmul.f32 %v439, %v467
      %v476 = vperm.slane %v415, 3
      %v477 = vperm.slane %v416, 3
      %480 = vrot.lane.b32.xlu0 %v476, 16
      %v481 = vpop.permute.xlu0 %480
      %482 = vrot.lane.b32.xlu0 %v477, 16
      %v483 = vpop.permute.xlu0 %482
      %vm484 = vcmask 130048
      %v485 = vsel %vm484, %v481, %v483
      %v489 = vmul.f32 %v438, %v481
      %v490 = vmul.f32 %v434, %v485
      %v491 = vmul.f32 %v439, %v483
      %v492 = vperm.slane %v415, 4
      %v493 = vperm.slane %v416, 4
      %496 = vrot.lane.b32.xlu0 %v492, 17
      %v497 = vpop.permute.xlu0 %496
      %498 = vrot.lane.b32.xlu0 %v493, 17
      %v499 = vpop.permute.xlu0 %498
      %v500 = vsel %vm433, %v497, %v499
      %v504 = vmul.f32 %v438, %v497
      %v505 = vmul.f32 %v434, %v500
      %v506 = vmul.f32 %v439, %v499
      %v507 = vperm.slane %v415, 5
      %v508 = vperm.slane %v416, 5
      %511 = vrot.lane.b32.xlu0 %v507, 18
      %v512 = vpop.permute.xlu0 %511
      %513 = vrot.lane.b32.xlu0 %v508, 18
      %v514 = vpop.permute.xlu0 %513
      %vm515 = vcmask 146432
      %v516 = vsel %vm515, %v512, %v514
      %v520 = vmul.f32 %v438, %v512
      %v521 = vmul.f32 %v434, %v516
      %v522 = vmul.f32 %v439, %v514
      %v523 = vperm.slane %v415, 6
      %v524 = vperm.slane %v416, 6
      %527 = vrot.lane.b32.xlu0 %v523, 32
      %v528 = vpop.permute.xlu0 %527
      %529 = vrot.lane.b32.xlu0 %v524, 32
      %v530 = vpop.permute.xlu0 %529
      %vm531 = vcmask 261120
      %v532 = vsel %vm531, %v528, %v530
      %v536 = vmul.f32 %v438, %v528
      %v537 = vmul.f32 %v434, %v532
      %v538 = vmul.f32 %v439, %v530
      %v539 = vperm.slane %v415, 7
      %v540 = vperm.slane %v416, 7
      %543 = vrot.lane.b32.xlu0 %v539, 33
      %v544 = vpop.permute.xlu0 %543
      %545 = vrot.lane.b32.xlu0 %v540, 33
      %v546 = vpop.permute.xlu0 %545
      %vm547 = vcmask 269312
      %v548 = vsel %vm547, %v544, %v546
      %v552 = vmul.f32 %v438, %v544
      %v553 = vmul.f32 %v434, %v548
      %v554 = vmul.f32 %v439, %v546
      %v555 = vperm.slane %v417, 0
      %v556 = vperm.slane %v418, 0
      %559 = vrot.lane.b32.xlu0 %v555, 34
      %v560 = vpop.permute.xlu0 %559
      %561 = vrot.lane.b32.xlu0 %v556, 34
      %v562 = vpop.permute.xlu0 %561
      %vm563 = vcmask 277504
      %v564 = vsel %vm563, %v560, %v562
      %v568 = vmul.f32 %v438, %v560
      %v569 = vmul.f32 %v434, %v564
      %v570 = vmul.f32 %v439, %v562
      %v574 = vrot.slane %v457, 4
      %v575 = vrot.slane %v458, 4
      %v576 = vrot.slane %v459, 4
      %577 = vrot.lane.b32.xlu0 %v574, 127
      %v578 = vpop.permute.xlu0 %577
      %579 = vrot.lane.b32.xlu0 %v575, 127
      %v580 = vpop.permute.xlu0 %579
      %581 = vrot.lane.b32.xlu0 %v576, 127
      %v582 = vpop.permute.xlu0 %581
      %vm583 = vcmask 1039360
      %v584 = vsel %vm583, %v578, %v580
      %v585 = vsel %vm583, %v580, %v582
      %591 = vrot.lane.b32.xlu0 %v473, 126
      %v592 = vpop.permute.xlu0 %591
      %593 = vrot.lane.b32.xlu0 %v474, 126
      %v594 = vpop.permute.xlu0 %593
      %595 = vrot.lane.b32.xlu0 %v475, 126
      %v596 = vpop.permute.xlu0 %595
      %vm597 = vcmask 1031168
      %v598 = vsel %vm597, %v592, %v594
      %v599 = vsel %vm597, %v594, %v596
      %v605 = vrot.slane %v489, 4
      %v606 = vrot.slane %v490, 4
      %v607 = vrot.slane %v491, 4
      %608 = vrot.lane.b32.xlu0 %v605, 112
      %v609 = vpop.permute.xlu0 %608
      %610 = vrot.lane.b32.xlu0 %v606, 112
      %v611 = vpop.permute.xlu0 %610
      %612 = vrot.lane.b32.xlu0 %v607, 112
      %v613 = vpop.permute.xlu0 %612
      %vm614 = vcmask 916480
      %v615 = vsel %vm614, %v609, %v611
      %v616 = vsel %vm614, %v611, %v613
      %622 = vrot.lane.b32.xlu0 %v504, 111
      %v623 = vpop.permute.xlu0 %622
      %624 = vrot.lane.b32.xlu0 %v505, 111
      %v625 = vpop.permute.xlu0 %624
      %626 = vrot.lane.b32.xlu0 %v506, 111
      %v627 = vpop.permute.xlu0 %626
      %vm628 = vcmask 908288
      %v629 = vsel %vm628, %v623, %v625
      %v630 = vsel %vm628, %v625, %v627
      %v636 = vrot.slane %v520, 4
      %v637 = vrot.slane %v521, 4
      %v638 = vrot.slane %v522, 4
      %639 = vrot.lane.b32.xlu0 %v636, 110
      %v640 = vpop.permute.xlu0 %639
      %641 = vrot.lane.b32.xlu0 %v637, 110
      %v642 = vpop.permute.xlu0 %641
      %643 = vrot.lane.b32.xlu0 %v638, 110
      %v644 = vpop.permute.xlu0 %643
      %vm645 = vcmask 900096
      %v646 = vsel %vm645, %v640, %v642
      %v647 = vsel %vm645, %v642, %v644
      %653 = vrot.lane.b32.xlu0 %v536, 96
      %v654 = vpop.permute.xlu0 %653
      %655 = vrot.lane.b32.xlu0 %v537, 96
      %v656 = vpop.permute.xlu0 %655
      %657 = vrot.lane.b32.xlu0 %v538, 96
      %v658 = vpop.permute.xlu0 %657
      %vm659 = vcmask 785408
      %v660 = vsel %vm659, %v654, %v656
      %v661 = vsel %vm659, %v656, %v658
      %v667 = vrot.slane %v552, 4
      %v668 = vrot.slane %v553, 4
      %v669 = vrot.slane %v554, 4
      %670 = vrot.lane.b32.xlu0 %v667, 95
      %v671 = vpop.permute.xlu0 %670
      %672 = vrot.lane.b32.xlu0 %v668, 95
      %v673 = vpop.permute.xlu0 %672
      %674 = vrot.lane.b32.xlu0 %v669, 95
      %v675 = vpop.permute.xlu0 %674
      %vm676 = vcmask 777216
      %v677 = vsel %vm676, %v671, %v673
      %v678 = vsel %vm676, %v673, %v675
      %684 = vrot.lane.b32.xlu0 %v568, 94
      %v685 = vpop.permute.xlu0 %684
      %686 = vrot.lane.b32.xlu0 %v569, 94
      %v687 = vpop.permute.xlu0 %686
      %688 = vrot.lane.b32.xlu0 %v570, 94
      %v689 = vpop.permute.xlu0 %688
      %vm690 = vcmask 769024
      %v691 = vsel %vm690, %v685, %v687
      %v692 = vsel %vm690, %v687, %v689
      %vm693 = vcmask 1043456
      %v694 = vsel %vm693, %v442, %v584
      %v695 = vsel %vm693, %v443, %v585
      %v696 = vsel %vm693, %v598, %v615
      %v697 = vsel %vm693, %v599, %v616
      %v698 = vsel %vm693, %v629, %v646
      %v699 = vsel %vm693, %v630, %v647
      %v700 = vsel %vm693, %v660, %v677
      %v701 = vsel %vm693, %v661, %v678
      %v702 = vld [vmem:[%s5] sm:$0xff]
      %704 = vset.pattern.permute.xlu0 0
      %705 = vperm.xlu0 %704, %v702
      %v706 = vpop.permute.xlu0 %705
      %vm708 = vcmask 293888
      %v710 = vsel %vm708, %v424, 0
      %v712 = vsel %vm693, %v691, 0
      %v714 = vsel %vm693, %v692, 0
      %716 = vmatpush.msra.mxu0 0.0
      %717 = vmatpush.msra.mxu0 0.0
      %718 = vmatpush.msra.mxu0 0.0
      %719 = vmatpush.msra.mxu0 0.0
      %720 = vmatpush.msra.mxu0 0.0
      %721 = vmatpush.msra.mxu0 0.0
      %722 = vmatpush.msra.mxu0 0.0
      %723 = vmatpush.msra.mxu0 0.0
      %724 = vmatpush.msra.mxu0 0.0
      %725 = vmatpush.msra.mxu0 0.0
      %726 = vmatpush.msra.mxu0 0.0
      %727 = vmatpush.msra.mxu0 %v712
      %728 = vmatpush.msra.mxu0 %v700
      %729 = vmatpush.msra.mxu0 %v698
      %730 = vmatpush.msra.mxu0 %v696
      %731 = vmatpush.msra.mxu0 %v694
      %732 = vmatmul.f32.gmra.mxu0 %v710
      %v733 = vpop.f32.mrf.mxu0
      %v734 = vadd.f32 %v706, %v733
      %735 = vdwg.mxu0
      %736 = vmatpush.msra.mxu0 0.0
      %737 = vmatpush.msra.mxu0 0.0
      %738 = vmatpush.msra.mxu0 0.0
      %739 = vmatpush.msra.mxu0 0.0
      %740 = vmatpush.msra.mxu0 0.0
      %741 = vmatpush.msra.mxu0 0.0
      %742 = vmatpush.msra.mxu0 0.0
      %743 = vmatpush.msra.mxu0 0.0
      %744 = vmatpush.msra.mxu0 0.0
      %745 = vmatpush.msra.mxu0 0.0
      %746 = vmatpush.msra.mxu0 0.0
      %747 = vmatpush.msra.mxu0 %v714
      %748 = vmatpush.msra.mxu0 %v701
      %749 = vmatpush.msra.mxu0 %v699
      %750 = vmatpush.msra.mxu0 %v697
      %751 = vmatpush.msra.mxu0 %v695
      %752 = vmatmul.f32.gmra.mxu0 %v710
      %v753 = vpop.f32.mrf.mxu0
      %v754 = vadd.f32 %v706, %v753
      %755 = vdwg.mxu0
      %v756 = vmax.f32 %v734, 0.0
      %v757 = vmax.f32 %v754, 0.0
      %760 = vrot.lane.b32.xlu0 %v756, 127
      %v761 = vpop.permute.xlu0 %760
      %762 = vrot.lane.b32.xlu0 %v757, 127
      %v763 = vpop.permute.xlu0 %762
      %v764 = vsel %vm583, %v761, %v763
      %v767 = vsel %vm583, %v763, 0.0
      %v768 = vmax.f32 %v756, %v764
      %v769 = vmax.f32 %v757, %v767
      %770 = vrot.lane.b32.xlu0 %v756, 112
      %v771 = vpop.permute.xlu0 %770
      %772 = vrot.lane.b32.xlu0 %v757, 112
      %v773 = vpop.permute.xlu0 %772
      %v774 = vsel %vm614, %v771, %v773
      %v777 = vsel %vm614, %v773, 0.0
      %778 = vrot.lane.b32.xlu0 %v756, 111
      %v779 = vpop.permute.xlu0 %778
      %780 = vrot.lane.b32.xlu0 %v757, 111
      %v781 = vpop.permute.xlu0 %780
      %v782 = vsel %vm628, %v779, %v781
      %v785 = vsel %vm628, %v781, 0.0
      %v786 = vmax.f32 %v774, %v782
      %v787 = vmax.f32 %v777, %v785
      %v788 = vmax.f32 %v768, %v786
      %v789 = vmax.f32 %v769, %v787
      %v790 = vld [vmem:[%s6] sm:$0xff]
      %v791 = vld [vmem:[%s6 + $0x8] sm:$0xff]
      %794 = vrot.lane.b32.xlu0 %v788, 34
      %v795 = vpop.permute.xlu0 %794
      %796 = vrot.lane.b32.xlu0 %v789, 34
      %v797 = vpop.permute.xlu0 %796
      %v798 = vsel %vm563, %v795, %v797
      %v802 = vsel %vm563, 0.0, %v795
      %v803 = vsel %vm563, %v797, 0.0
      %v804 = vperm.slane %v419, 0
      %v805 = vperm.slane %v420, 0
      %v806 = vmul.f32 %v802, %v804
      %v807 = vmul.f32 %v798, %v805
      %v808 = vperm.slane %v419, 1
      %v809 = vperm.slane %v420, 1
      %812 = vrot.lane.b32.xlu0 %v808, 2
      %v813 = vpop.permute.xlu0 %812
      %814 = vrot.lane.b32.xlu0 %v809, 2
      %v815 = vpop.permute.xlu0 %814
      %v816 = vsel %vm468, %v813, %v815
      %v820 = vmul.f32 %v802, %v813
      %v821 = vmul.f32 %v798, %v816
      %v822 = vmul.f32 %v803, %v815
      %v823 = vperm.slane %v419, 2
      %v824 = vperm.slane %v420, 2
      %827 = vrot.lane.b32.xlu0 %v823, 4
      %v828 = vpop.permute.xlu0 %827
      %829 = vrot.lane.b32.xlu0 %v824, 4
      %v830 = vpop.permute.xlu0 %829
      %vm831 = vcmask 31744
      %v832 = vsel %vm831, %v828, %v830
      %v836 = vmul.f32 %v802, %v828
      %v837 = vmul.f32 %v798, %v832
      %v838 = vmul.f32 %v803, %v830
      %v839 = vperm.slane %v419, 3
      %v840 = vperm.slane %v420, 3
      %843 = vrot.lane.b32.xlu0 %v839, 32
      %v844 = vpop.permute.xlu0 %843
      %845 = vrot.lane.b32.xlu0 %v840, 32
      %v846 = vpop.permute.xlu0 %845
      %v847 = vsel %vm531, %v844, %v846
      %v851 = vmul.f32 %v802, %v844
      %v852 = vmul.f32 %v798, %v847
      %v853 = vmul.f32 %v803, %v846
      %v854 = vperm.slane %v419, 4
      %v855 = vperm.slane %v420, 4
      %858 = vrot.lane.b32.xlu0 %v854, 34
      %v859 = vpop.permute.xlu0 %858
      %860 = vrot.lane.b32.xlu0 %v855, 34
      %v861 = vpop.permute.xlu0 %860
      %v862 = vsel %vm563, %v859, %v861
      %v866 = vmul.f32 %v802, %v859
      %v867 = vmul.f32 %v798, %v862
      %v868 = vmul.f32 %v803, %v861
      %v869 = vperm.slane %v419, 5
      %v870 = vperm.slane %v420, 5
      %873 = vrot.lane.b32.xlu0 %v869, 36
      %v874 = vpop.permute.xlu0 %873
      %875 = vrot.lane.b32.xlu0 %v870, 36
      %v876 = vpop.permute.xlu0 %875
      %v877 = vsel %vm708, %v874, %v876
      %v881 = vmul.f32 %v802, %v874
      %v882 = vmul.f32 %v798, %v877
      %v883 = vmul.f32 %v803, %v876
      %v884 = vperm.slane %v419, 6
      %v885 = vperm.slane %v420, 6
      %888 = vrot.lane.b32.xlu0 %v884, 64
      %v889 = vpop.permute.xlu0 %888
      %890 = vrot.lane.b32.xlu0 %v885, 64
      %v891 = vpop.permute.xlu0 %890
      %vm892 = vcmask 523264
      %v893 = vsel %vm892, %v889, %v891
      %v897 = vmul.f32 %v802, %v889
      %v898 = vmul.f32 %v798, %v893
      %v899 = vmul.f32 %v803, %v891
      %v900 = vperm.slane %v419, 7
      %v901 = vperm.slane %v420, 7
      %904 = vrot.lane.b32.xlu0 %v900, 66
      %v905 = vpop.permute.xlu0 %904
      %906 = vrot.lane.b32.xlu0 %v901, 66
      %v907 = vpop.permute.xlu0 %906
      %vm908 = vcmask 539648
      %v909 = vsel %vm908, %v905, %v907
      %v913 = vmul.f32 %v802, %v905
      %v914 = vmul.f32 %v798, %v909
      %v915 = vmul.f32 %v803, %v907
      %v916 = vperm.slane %v421, 0
      %v917 = vperm.slane %v422, 0
      %920 = vrot.lane.b32.xlu0 %v916, 68
      %v921 = vpop.permute.xlu0 %920
      %922 = vrot.lane.b32.xlu0 %v917, 68
      %v923 = vpop.permute.xlu0 %922
      %vm924 = vcmask 556032
      %v925 = vsel %vm924, %v921, %v923
      %v929 = vmul.f32 %v802, %v921
      %v930 = vmul.f32 %v798, %v925
      %v931 = vmul.f32 %v803, %v923
      %935 = vrot.lane.b32.xlu0 %v820, 126
      %v936 = vpop.permute.xlu0 %935
      %937 = vrot.lane.b32.xlu0 %v821, 126
      %v938 = vpop.permute.xlu0 %937
      %939 = vrot.lane.b32.xlu0 %v822, 126
      %v940 = vpop.permute.xlu0 %939
      %v941 = vsel %vm597, %v936, %v938
      %v942 = vsel %vm597, %v938, %v940
      %948 = vrot.lane.b32.xlu0 %v836, 124
      %v949 = vpop.permute.xlu0 %948
      %950 = vrot.lane.b32.xlu0 %v837, 124
      %v951 = vpop.permute.xlu0 %950
      %952 = vrot.lane.b32.xlu0 %v838, 124
      %v953 = vpop.permute.xlu0 %952
      %vm954 = vcmask 1014784
      %v955 = vsel %vm954, %v949, %v951
      %v956 = vsel %vm954, %v951, %v953
      %962 = vrot.lane.b32.xlu0 %v851, 96
      %v963 = vpop.permute.xlu0 %962
      %964 = vrot.lane.b32.xlu0 %v852, 96
      %v965 = vpop.permute.xlu0 %964
      %966 = vrot.lane.b32.xlu0 %v853, 96
      %v967 = vpop.permute.xlu0 %966
      %v968 = vsel %vm659, %v963, %v965
      %v969 = vsel %vm659, %v965, %v967
      %975 = vrot.lane.b32.xlu0 %v866, 94
      %v976 = vpop.permute.xlu0 %975
      %977 = vrot.lane.b32.xlu0 %v867, 94
      %v978 = vpop.permute.xlu0 %977
      %979 = vrot.lane.b32.xlu0 %v868, 94
      %v980 = vpop.permute.xlu0 %979
      %v981 = vsel %vm690, %v976, %v978
      %v982 = vsel %vm690, %v978, %v980
      %988 = vrot.lane.b32.xlu0 %v881, 92
      %v989 = vpop.permute.xlu0 %988
      %990 = vrot.lane.b32.xlu0 %v882, 92
      %v991 = vpop.permute.xlu0 %990
      %992 = vrot.lane.b32.xlu0 %v883, 92
      %v993 = vpop.permute.xlu0 %992
      %vm994 = vcmask 752640
      %v995 = vsel %vm994, %v989, %v991
      %v996 = vsel %vm994, %v991, %v993
      %1002 = vrot.lane.b32.xlu0 %v897, 64
      %v1003 = vpop.permute.xlu0 %1002
      %1004 = vrot.lane.b32.xlu0 %v898, 64
      %v1005 = vpop.permute.xlu0 %1004
      %1006 = vrot.lane.b32.xlu0 %v899, 64
      %v1007 = vpop.permute.xlu0 %1006
      %v1008 = vsel %vm892, %v1003, %v1005
      %v1009 = vsel %vm892, %v1005, %v1007
      %1015 = vrot.lane.b32.xlu0 %v913, 62
      %v1016 = vpop.permute.xlu0 %1015
      %1017 = vrot.lane.b32.xlu0 %v914, 62
      %v1018 = vpop.permute.xlu0 %1017
      %1019 = vrot.lane.b32.xlu0 %v915, 62
      %v1020 = vpop.permute.xlu0 %1019
      %vm1021 = vcmask 506880
      %v1022 = vsel %vm1021, %v1016, %v1018
      %v1023 = vsel %vm1021, %v1018, %v1020
      %1029 = vrot.lane.b32.xlu0 %v929, 60
      %v1030 = vpop.permute.xlu0 %1029
      %1031 = vrot.lane.b32.xlu0 %v930, 60
      %v1032 = vpop.permute.xlu0 %1031
      %1033 = vrot.lane.b32.xlu0 %v931, 60
      %v1034 = vpop.permute.xlu0 %1033
      %vm1035 = vcmask 490496
      %v1036 = vsel %vm1035, %v1030, %v1032
      %v1037 = vsel %vm1035, %v1032, %v1034
      %v1040 = vld [vmem:[%s7] sm:$0xff]
      %v1041 = vld [vmem:[%s7 + $0x8] sm:$0xff]
      %1043 = vset.pattern.permute.xlu0 0
      %1044 = vperm.xlu0 %1043, %v1040
      %v1045 = vpop.permute.xlu0 %1044
      %1048 = vset.pattern.permute.xlu0 0
      %1049 = vperm.xlu0 %1048, %v1041
      %v1050 = vpop.permute.xlu0 %1049
      %vm1052 = vcmask 588800
      %v1054 = vsel %vm1052, %v790, 0
      %v1057 = vsel %vm1052, %v791, 0
      %1059 = vmatpush.msra.mxu0 0.0
      %1060 = vmatpush.msra.mxu0 0.0
      %1061 = vmatpush.msra.mxu0 0.0
      %1062 = vmatpush.msra.mxu0 0.0
      %1063 = vmatpush.msra.mxu0 0.0
      %1064 = vmatpush.msra.mxu0 0.0
      %1065 = vmatpush.msra.mxu0 0.0
      %1066 = vmatpush.msra.mxu0 %v1036
      %1067 = vmatpush.msra.mxu0 %v1022
      %1068 = vmatpush.msra.mxu0 %v1008
      %1069 = vmatpush.msra.mxu0 %v995
      %1070 = vmatpush.msra.mxu0 %v981
      %1071 = vmatpush.msra.mxu0 %v968
      %1072 = vmatpush.msra.mxu0 %v955
      %1073 = vmatpush.msra.mxu0 %v941
      %1074 = vmatpush.msra.mxu0 %v806
      %1075 = vmatmul.f32.gmra.mxu0 %v1054
      %v1076 = vpop.f32.mrf.mxu0
      %v1077 = vadd.f32 %v1045, %v1076
      %1078 = vmatmul.f32.gmra.mxu0 %v1057
      %v1079 = vpop.f32.mrf.mxu0
      %v1080 = vadd.f32 %v1050, %v1079
      %1081 = vdwg.mxu0
      %1082 = vmatpush.msra.mxu0 0.0
      %1083 = vmatpush.msra.mxu0 0.0
      %1084 = vmatpush.msra.mxu0 0.0
      %1085 = vmatpush.msra.mxu0 0.0
      %1086 = vmatpush.msra.mxu0 0.0
      %1087 = vmatpush.msra.mxu0 0.0
      %1088 = vmatpush.msra.mxu0 0.0
      %1089 = vmatpush.msra.mxu0 %v1037
      %1090 = vmatpush.msra.mxu0 %v1023
      %1091 = vmatpush.msra.mxu0 %v1009
      %1092 = vmatpush.msra.mxu0 %v996
      %1093 = vmatpush.msra.mxu0 %v982
      %1094 = vmatpush.msra.mxu0 %v969
      %1095 = vmatpush.msra.mxu0 %v956
      %1096 = vmatpush.msra.mxu0 %v942
      %1097 = vmatpush.msra.mxu0 %v807
      %1098 = vmatmul.f32.gmra.mxu0 %v1054
      %v1099 = vpop.f32.mrf.mxu0
      %v1100 = vadd.f32 %v1045, %v1099
      %1101 = vmatmul.f32.gmra.mxu0 %v1057
      %v1102 = vpop.f32.mrf.mxu0
      %v1103 = vadd.f32 %v1050, %v1102
      %1104 = vdwg.mxu0
      %v1105 = vmax.f32 %v1077, 0.0
      %v1106 = vmax.f32 %v1100, 0.0
      %v1107 = vmax.f32 %v1080, 0.0
      %v1108 = vmax.f32 %v1103, 0.0
      %v1110 = vperm.slane %v423, 0
      %v1111 = vperm.slane %v423, 4
      %v1114 = vperm.slane %v1110, 0
      %v1115 = vperm.slane %v1111, 0
      %v1116 = vmul.f32 %v1105, %v1114
      %v1117 = vmul.f32 %v1106, %v1115
      %v1118 = vmul.f32 %v1107, %v1114
      %v1119 = vmul.f32 %v1108, %v1115
      %1124 = vrot.lane.b32.xlu0 %v1105, 1
      %v1125 = vpop.permute.xlu0 %1124
      %1126 = vrot.lane.b32.xlu0 %v1106, 1
      %v1127 = vpop.permute.xlu0 %1126
      %1128 = vrot.lane.b32.xlu0 %v1107, 1
      %v1129 = vpop.permute.xlu0 %1128
      %1130 = vrot.lane.b32.xlu0 %v1108, 1
      %v1131 = vpop.permute.xlu0 %1130
      %v1132 = vsel %vm452, %v1125, %v1127
      %v1133 = vsel %vm452, %v1129, %v1131
      %v1138 = vsel %vm452, 0.0, %v1125
      %v1139 = vsel %vm452, 0.0, %v1129
      %v1140 = vperm.slane %v423, 1
      %v1141 = vperm.slane %v423, 5
      %v1144 = vperm.slane %v1140, 1
      %v1145 = vperm.slane %v1141, 1
      %v1146 = vmul.f32 %v1138, %v1144
      %v1147 = vmul.f32 %v1132, %v1145
      %v1148 = vmul.f32 %v1139, %v1144
      %v1149 = vmul.f32 %v1133, %v1145
      %v1150 = vadd.f32 %v1116, %v1146
      %v1151 = vadd.f32 %v1117, %v1147
      %v1152 = vadd.f32 %v1118, %v1148
      %v1153 = vadd.f32 %v1119, %v1149
      %1154 = vrot.lane.b32.xlu0 %v1105, 16
      %v1155 = vpop.permute.xlu0 %1154
      %1156 = vrot.lane.b32.xlu0 %v1106, 16
      %v1157 = vpop.permute.xlu0 %1156
      %1158 = vrot.lane.b32.xlu0 %v1107, 16
      %v1159 = vpop.permute.xlu0 %1158
      %1160 = vrot.lane.b32.xlu0 %v1108, 16
      %v1161 = vpop.permute.xlu0 %1160
      %v1162 = vsel %vm484, %v1155, %v1157
      %v1163 = vsel %vm484, %v1159, %v1161
      %v1168 = vsel %vm484, 0.0, %v1155
      %v1169 = vsel %vm484, 0.0, %v1159
      %v1170 = vperm.slane %v423, 2
      %v1171 = vperm.slane %v423, 6
      %v1174 = vperm.slane %v1170, 2
      %v1175 = vperm.slane %v1171, 2
      %v1176 = vmul.f32 %v1168, %v1174
      %v1177 = vmul.f32 %v1162, %v1175
      %v1178 = vmul.f32 %v1169, %v1174
      %v1179 = vmul.f32 %v1163, %v1175
      %v1180 = vadd.f32 %v1150, %v1176
      %v1181 = vadd.f32 %v1151, %v1177
      %v1182 = vadd.f32 %v1152, %v1178
      %v1183 = vadd.f32 %v1153, %v1179
      %1184 = vrot.lane.b32.xlu0 %v1105, 17
      %v1185 = vpop.permute.xlu0 %1184
      %1186 = vrot.lane.b32.xlu0 %v1106, 17
      %v1187 = vpop.permute.xlu0 %1186
      %1188 = vrot.lane.b32.xlu0 %v1107, 17
      %v1189 = vpop.permute.xlu0 %1188
      %1190 = vrot.lane.b32.xlu0 %v1108, 17
      %v1191 = vpop.permute.xlu0 %1190
      %v1192 = vsel %vm433, %v1185, %v1187
      %v1193 = vsel %vm433, %v1189, %v1191
      %v1198 = vsel %vm433, 0.0, %v1185
      %v1199 = vsel %vm433, 0.0, %v1189
      %v1200 = vperm.slane %v423, 3
      %v1201 = vperm.slane %v423, 7
      %v1204 = vperm.slane %v1200, 3
      %v1205 = vperm.slane %v1201, 3
      %v1206 = vmul.f32 %v1198, %v1204
      %v1207 = vmul.f32 %v1192, %v1205
      %v1208 = vmul.f32 %v1199, %v1204
      %v1209 = vmul.f32 %v1193, %v1205
      %v1210 = vadd.f32 %v1180, %v1206
      %v1211 = vadd.f32 %v1181, %v1207
      %v1212 = vadd.f32 %v1182, %v1208
      %v1213 = vadd.f32 %v1183, %v1209
      %v1214 = vld [vmem:[%s8] sm:$0xff]
      %v1215 = vld [vmem:[%s8 + $0x8] sm:$0xff]
      %1216 = vrot.lane.b32.xlu0 %v756, 17
      %v1217 = vpop.permute.xlu0 %1216
      %1218 = vrot.lane.b32.xlu0 %v757, 17
      %v1219 = vpop.permute.xlu0 %1218
      %v1220 = vsel %vm433, %v1217, %v1219
      %v1224 = vsel %vm433, 0.0, %v1217
      %v1225 = vsel %vm433, %v1219, 0.0
      %1230 = vrot.lane.b32.xlu0 %v1210, 17
      %v1231 = vpop.permute.xlu0 %1230
      %1232 = vrot.lane.b32.xlu0 %v1211, 17
      %v1233 = vpop.permute.xlu0 %1232
      %1234 = vrot.lane.b32.xlu0 %v1212, 17
      %v1235 = vpop.permute.xlu0 %1234
      %1236 = vrot.lane.b32.xlu0 %v1213, 17
      %v1237 = vpop.permute.xlu0 %1236
      %v1238 = vsel %vm433, %v1231, %v1233
      %v1239 = vsel %vm433, %v1235, %v1237
      %v1246 = vsel %vm433, 0.0, %v1231
      %v1247 = vsel %vm433, 0.0, %v1235
      %v1248 = vsel %vm433, %v1233, 0.0
      %v1249 = vsel %vm433, %v1237, 0.0
      %v1250 = vmul.f32 %v1224, %v440
      %v1251 = vmul.f32 %v1220, %v441
      %v1252 = vmul.f32 %v1246, %v440
      %v1253 = vmul.f32 %v1238, %v441
      %v1254 = vmul.f32 %v1247, %v440
      %v1255 = vmul.f32 %v1239, %v441
      %v1256 = vmul.f32 %v1224, %v449
      %v1257 = vmul.f32 %v1220, %v453
      %v1258 = vmul.f32 %v1225, %v451
      %v1259 = vmul.f32 %v1246, %v449
      %v1260 = vmul.f32 %v1238, %v453
      %v1261 = vmul.f32 %v1248, %v451
      %v1262 = vmul.f32 %v1247, %v449
      %v1263 = vmul.f32 %v1239, %v453
      %v1264 = vmul.f32 %v1249, %v451
      %v1265 = vmul.f32 %v1224, %v465
      %v1266 = vmul.f32 %v1220, %v469
      %v1267 = vmul.f32 %v1225, %v467
      %v1268 = vmul.f32 %v1246, %v465
      %v1269 = vmul.f32 %v1238, %v469
      %v1270 = vmul.f32 %v1248, %v467
      %v1271 = vmul.f32 %v1247, %v465
      %v1272 = vmul.f32 %v1239, %v469
      %v1273 = vmul.f32 %v1249, %v467
      %v1274 = vmul.f32 %v1224, %v481
      %v1275 = vmul.f32 %v1220, %v485
      %v1276 = vmul.f32 %v1225, %v483
      %v1277 = vmul.f32 %v1246, %v481
      %v1278 = vmul.f32 %v1238, %v485
      %v1279 = vmul.f32 %v1248, %v483
      %v1280 = vmul.f32 %v1247, %v481
      %v1281 = vmul.f32 %v1239, %v485
      %v1282 = vmul.f32 %v1249, %v483
      %v1283 = vmul.f32 %v1224, %v497
      %v1284 = vmul.f32 %v1220, %v500
      %v1285 = vmul.f32 %v1225, %v499
      %v1286 = vmul.f32 %v1246, %v497
      %v1287 = vmul.f32 %v1238, %v500
      %v1288 = vmul.f32 %v1248, %v499
      %v1289 = vmul.f32 %v1247, %v497
      %v1290 = vmul.f32 %v1239, %v500
      %v1291 = vmul.f32 %v1249, %v499
      %v1292 = vmul.f32 %v1224, %v512
      %v1293 = vmul.f32 %v1220, %v516
      %v1294 = vmul.f32 %v1225, %v514
      %v1295 = vmul.f32 %v1246, %v512
      %v1296 = vmul.f32 %v1238, %v516
      %v1297 = vmul.f32 %v1248, %v514
      %v1298 = vmul.f32 %v1247, %v512
      %v1299 = vmul.f32 %v1239, %v516
      %v1300 = vmul.f32 %v1249, %v514
      %v1301 = vmul.f32 %v1224, %v528
      %v1302 = vmul.f32 %v1220, %v532
      %v1303 = vmul.f32 %v1225, %v530
      %v1304 = vmul.f32 %v1246, %v528
      %v1305 = vmul.f32 %v1238, %v532
      %v1306 = vmul.f32 %v1248, %v530
      %v1307 = vmul.f32 %v1247, %v528
      %v1308 = vmul.f32 %v1239, %v532
      %v1309 = vmul.f32 %v1249, %v530
      %v1310 = vmul.f32 %v1224, %v544
      %v1311 = vmul.f32 %v1220, %v548
      %v1312 = vmul.f32 %v1225, %v546
      %v1313 = vmul.f32 %v1246, %v544
      %v1314 = vmul.f32 %v1238, %v548
      %v1315 = vmul.f32 %v1248, %v546
      %v1316 = vmul.f32 %v1247, %v544
      %v1317 = vmul.f32 %v1239, %v548
      %v1318 = vmul.f32 %v1249, %v546
      %v1319 = vmul.f32 %v1224, %v560
      %v1320 = vmul.f32 %v1220, %v564
      %v1321 = vmul.f32 %v1225, %v562
      %v1322 = vmul.f32 %v1246, %v560
      %v1323 = vmul.f32 %v1238, %v564
      %v1324 = vmul.f32 %v1248, %v562
      %v1325 = vmul.f32 %v1247, %v560
      %v1326 = vmul.f32 %v1239, %v564
      %v1327 = vmul.f32 %v1249, %v562
      %1331 = vrot.lane.b32.xlu0 %v1256, 127
      %v1332 = vpop.permute.xlu0 %1331
      %1333 = vrot.lane.b32.xlu0 %v1257, 127
      %v1334 = vpop.permute.xlu0 %1333
      %1335 = vrot.lane.b32.xlu0 %v1258, 127
      %v1336 = vpop.permute.xlu0 %1335
      %v1337 = vsel %vm583, %v1332, %v1334
      %v1338 = vsel %vm583, %v1334, %v1336
      %1347 = vrot.lane.b32.xlu0 %v1259, 127
      %v1348 = vpop.permute.xlu0 %1347
      %1349 = vrot.lane.b32.xlu0 %v1260, 127
      %v1350 = vpop.permute.xlu0 %1349
      %1351 = vrot.lane.b32.xlu0 %v1261, 127
      %v1352 = vpop.permute.xlu0 %1351
      %1353 = vrot.lane.b32.xlu0 %v1262, 127
      %v1354 = vpop.permute.xlu0 %1353
      %1355 = vrot.lane.b32.xlu0 %v1263, 127
      %v1356 = vpop.permute.xlu0 %1355
      %1357 = vrot.lane.b32.xlu0 %v1264, 127
      %v1358 = vpop.permute.xlu0 %1357
      %v1359 = vsel %vm583, %v1348, %v1350
      %v1360 = vsel %vm583, %v1350, %v1352
      %v1361 = vsel %vm583, %v1354, %v1356
      %v1362 = vsel %vm583, %v1356, %v1358
      %1370 = vrot.lane.b32.xlu0 %v1265, 126
      %v1371 = vpop.permute.xlu0 %1370
      %1372 = vrot.lane.b32.xlu0 %v1266, 126
      %v1373 = vpop.permute.xlu0 %1372
      %1374 = vrot.lane.b32.xlu0 %v1267, 126
      %v1375 = vpop.permute.xlu0 %1374
      %v1376 = vsel %vm597, %v1371, %v1373
      %v1377 = vsel %vm597, %v1373, %v1375
      %1386 = vrot.lane.b32.xlu0 %v1268, 126
      %v1387 = vpop.permute.xlu0 %1386
      %1388 = vrot.lane.b32.xlu0 %v1269, 126
      %v1389 = vpop.permute.xlu0 %1388
      %1390 = vrot.lane.b32.xlu0 %v1270, 126
      %v1391 = vpop.permute.xlu0 %1390
      %1392 = vrot.lane.b32.xlu0 %v1271, 126
      %v1393 = vpop.permute.xlu0 %1392
      %1394 = vrot.lane.b32.xlu0 %v1272, 126
      %v1395 = vpop.permute.xlu0 %1394
      %1396 = vrot.lane.b32.xlu0 %v1273, 126
      %v1397 = vpop.permute.xlu0 %1396
      %v1398 = vsel %vm597, %v1387, %v1389
      %v1399 = vsel %vm597, %v1389, %v1391
      %v1400 = vsel %vm597, %v1393, %v1395
      %v1401 = vsel %vm597, %v1395, %v1397
      %1409 = vrot.lane.b32.xlu0 %v1274, 112
      %v1410 = vpop.permute.xlu0 %1409
      %1411 = vrot.lane.b32.xlu0 %v1275, 112
      %v1412 = vpop.permute.xlu0 %1411
      %1413 = vrot.lane.b32.xlu0 %v1276, 112
      %v1414 = vpop.permute.xlu0 %1413
      %v1415 = vsel %vm614, %v1410, %v1412
      %v1416 = vsel %vm614, %v1412, %v1414
      %1425 = vrot.lane.b32.xlu0 %v1277, 112
      %v1426 = vpop.permute.xlu0 %1425
      %1427 = vrot.lane.b32.xlu0 %v1278, 112
      %v1428 = vpop.permute.xlu0 %1427
      %1429 = vrot.lane.b32.xlu0 %v1279, 112
      %v1430 = vpop.permute.xlu0 %1429
      %1431 = vrot.lane.b32.xlu0 %v1280, 112
      %v1432 = vpop.permute.xlu0 %1431
      %1433 = vrot.lane.b32.xlu0 %v1281, 112
      %v1434 = vpop.permute.xlu0 %1433
      %1435 = vrot.lane.b32.xlu0 %v1282, 112
      %v1436 = vpop.permute.xlu0 %1435
      %v1437 = vsel %vm614, %v1426, %v1428
      %v1438 = vsel %vm614, %v1428, %v1430
      %v1439 = vsel %vm614, %v1432, %v1434
      %v1440 = vsel %vm614, %v1434, %v1436
      %1448 = vrot.lane.b32.xlu0 %v1283, 111
      %v1449 = vpop.permute.xlu0 %1448
      %1450 = vrot.lane.b32.xlu0 %v1284, 111
      %v1451 = vpop.permute.xlu0 %1450
      %1452 = vrot.lane.b32.xlu0 %v1285, 111
      %v1453 = vpop.permute.xlu0 %1452
      %v1454 = vsel %vm628, %v1449, %v1451
      %v1455 = vsel %vm628, %v1451, %v1453
      %1464 = vrot.lane.b32.xlu0 %v1286, 111
      %v1465 = vpop.permute.xlu0 %1464
      %1466 = vrot.lane.b32.xlu0 %v1287, 111
      %v1467 = vpop.permute.xlu0 %1466
      %1468 = vrot.lane.b32.xlu0 %v1288, 111
      %v1469 = vpop.permute.xlu0 %1468
      %1470 = vrot.lane.b32.xlu0 %v1289, 111
      %v1471 = vpop.permute.xlu0 %1470
      %1472 = vrot.lane.b32.xlu0 %v1290, 111
      %v1473 = vpop.permute.xlu0 %1472
      %1474 = vrot.lane.b32.xlu0 %v1291, 111
      %v1475 = vpop.permute.xlu0 %1474
      %v1476 = vsel %vm628, %v1465, %v1467
      %v1477 = vsel %vm628, %v1467, %v1469
      %v1478 = vsel %vm628, %v1471, %v1473
      %v1479 = vsel %vm628, %v1473, %v1475
      %1487 = vrot.lane.b32.xlu0 %v1292, 110
      %v1488 = vpop.permute.xlu0 %1487
      %1489 = vrot.lane.b32.xlu0 %v1293, 110
      %v1490 = vpop.permute.xlu0 %1489
      %1491 = vrot.lane.b32.xlu0 %v1294, 110
      %v1492 = vpop.permute.xlu0 %1491
      %v1493 = vsel %vm645, %v1488, %v1490
      %v1494 = vsel %vm645, %v1490, %v1492
      %1503 = vrot.lane.b32.xlu0 %v1295, 110
      %v1504 = vpop.permute.xlu0 %1503
      %1505 = vrot.lane.b32.xlu0 %v1296, 110
      %v1506 = vpop.permute.xlu0 %1505
      %1507 = vrot.lane.b32.xlu0 %v1297, 110
      %v1508 = vpop.permute.xlu0 %1507
      %1509 = vrot.lane.b32.xlu0 %v1298, 110
      %v1510 = vpop.permute.xlu0 %1509
      %1511 = vrot.lane.b32.xlu0 %v1299, 110
      %v1512 = vpop.permute.xlu0 %1511
      %1513 = vrot.lane.b32.xlu0 %v1300, 110
      %v1514 = vpop.permute.xlu0 %1513
      %v1515 = vsel %vm645, %v1504, %v1506
      %v1516 = vsel %vm645, %v1506, %v1508
      %v1517 = vsel %vm645, %v1510, %v1512
      %v1518 = vsel %vm645, %v1512, %v1514
      %1526 = vrot.lane.b32.xlu0 %v1301, 96
      %v1527 = vpop.permute.xlu0 %1526
      %1528 = vrot.lane.b32.xlu0 %v1302, 96
      %v1529 = vpop.permute.xlu0 %1528
      %1530 = vrot.lane.b32.xlu0 %v1303, 96
      %v1531 = vpop.permute.xlu0 %1530
      %v1532 = vsel %vm659, %v1527, %v1529
      %v1533 = vsel %vm659, %v1529, %v1531
      %1542 = vrot.lane.b32.xlu0 %v1304, 96
      %v1543 = vpop.permute.xlu0 %1542
      %1544 = vrot.lane.b32.xlu0 %v1305, 96
      %v1545 = vpop.permute.xlu0 %1544
      %1546 = vrot.lane.b32.xlu0 %v1306, 96
      %v1547 = vpop.permute.xlu0 %1546
      %1548 = vrot.lane.b32.xlu0 %v1307, 96
      %v1549 = vpop.permute.xlu0 %1548
      %1550 = vrot.lane.b32.xlu0 %v1308, 96
      %v1551 = vpop.permute.xlu0 %1550
      %1552 = vrot.lane.b32.xlu0 %v1309, 96
      %v1553 = vpop.permute.xlu0 %1552
      %v1554 = vsel %vm659, %v1543, %v1545
      %v1555 = vsel %vm659, %v1545, %v1547
      %v1556 = vsel %vm659, %v1549, %v1551
      %v1557 = vsel %vm659, %v1551, %v1553
      %1565 = vrot.lane.b32.xlu0 %v1310, 95
      %v1566 = vpop.permute.xlu0 %1565
      %1567 = vrot.lane.b32.xlu0 %v1311, 95
      %v1568 = vpop.permute.xlu0 %1567
      %1569 = vrot.lane.b32.xlu0 %v1312, 95
      %v1570 = vpop.permute.xlu0 %1569
      %v1571 = vsel %vm676, %v1566, %v1568
      %v1572 = vsel %vm676, %v1568, %v1570
      %1581 = vrot.lane.b32.xlu0 %v1313, 95
      %v1582 = vpop.permute.xlu0 %1581
      %1583 = vrot.lane.b32.xlu0 %v1314, 95
      %v1584 = vpop.permute.xlu0 %1583
      %1585 = vrot.lane.b32.xlu0 %v1315, 95
      %v1586 = vpop.permute.xlu0 %1585
      %1587 = vrot.lane.b32.xlu0 %v1316, 95
      %v1588 = vpop.permute.xlu0 %1587
      %1589 = vrot.lane.b32.xlu0 %v1317, 95
      %v1590 = vpop.permute.xlu0 %1589
      %1591 = vrot.lane.b32.xlu0 %v1318, 95
      %v1592 = vpop.permute.xlu0 %1591
      %v1593 = vsel %vm676, %v1582, %v1584
      %v1594 = vsel %vm676, %v1584, %v1586
      %v1595 = vsel %vm676, %v1588, %v1590
      %v1596 = vsel %vm676, %v1590, %v1592
      %1610 = vrot.lane.b32.xlu0 %v1319, 94
      %v1611 = vpop.permute.xlu0 %1610
      %1612 = vrot.lane.b32.xlu0 %v1320, 94
      %v1613 = vpop.permute.xlu0 %1612
      %1614 = vrot.lane.b32.xlu0 %v1321, 94
      %v1615 = vpop.permute.xlu0 %1614
      %1616 = vrot.lane.b32.xlu0 %v1322, 94
      %v1617 = vpop.permute.xlu0 %1616
      %1618 = vrot.lane.b32.xlu0 %v1323, 94
      %v1619 = vpop.permute.xlu0 %1618
      %1620 = vrot.lane.b32.xlu0 %v1324, 94
      %v1621 = vpop.permute.xlu0 %1620
      %1622 = vrot.lane.b32.xlu0 %v1325, 94
      %v1623 = vpop.permute.xlu0 %1622
      %1624 = vrot.lane.b32.xlu0 %v1326, 94
      %v1625 = vpop.permute.xlu0 %1624
      %1626 = vrot.lane.b32.xlu0 %v1327, 94
      %v1627 = vpop.permute.xlu0 %1626
      %v1628 = vsel %vm690, %v1611, %v1613
      %v1629 = vsel %vm690, %v1613, %v1615
      %v1630 = vsel %vm690, %v1617, %v1619
      %v1631 = vsel %vm690, %v1619, %v1621
      %v1632 = vsel %vm690, %v1623, %v1625
      %v1633 = vsel %vm690, %v1625, %v1627
      %v1640 = vld [vmem:[%s9] sm:$0xff]
      %1642 = vset.pattern.permute.xlu0 0
      %1643 = vperm.xlu0 %1642, %v1640
      %v1644 = vpop.permute.xlu0 %1643
      %vm1646 = vcmask 719872
      %v1648 = vsel %vm1646, %v1215, 0
      %1650 = vmatpush.msra.mxu0 %v1493
      %1651 = vmatpush.msra.mxu0 %v1478
      %1652 = vmatpush.msra.mxu0 %v1476
      %1653 = vmatpush.msra.mxu0 %v1454
      %1654 = vmatpush.msra.mxu0 %v1439
      %1655 = vmatpush.msra.mxu0 %v1437
      %1656 = vmatpush.msra.mxu0 %v1415
      %1657 = vmatpush.msra.mxu0 %v1400
      %1658 = vmatpush.msra.mxu0 %v1398
      %1659 = vmatpush.msra.mxu0 %v1376
      %1660 = vmatpush.msra.mxu0 %v1361
      %1661 = vmatpush.msra.mxu0 %v1359
      %1662 = vmatpush.msra.mxu0 %v1337
      %1663 = vmatpush.msra.mxu0 %v1254
      %1664 = vmatpush.msra.mxu0 %v1252
      %1665 = vmatpush.msra.mxu0 %v1250
      %1666 = vmatmul.f32.gmra.mxu0 %v1214
      %v1667 = vpop.f32.mrf.mxu0
      %v1668 = vadd.f32 %v1644, %v1667
      %1669 = vdwg.mxu0
      %1670 = vmatpush.msra.mxu0 0.0
      %1671 = vmatpush.msra.mxu0 0.0
      %1672 = vmatpush.msra.mxu0 0.0
      %1673 = vmatpush.msra.mxu0 0.0
      %1674 = vmatpush.msra.mxu0 0.0
      %1675 = vmatpush.msra.mxu0 %v1632
      %1676 = vmatpush.msra.mxu0 %v1630
      %1677 = vmatpush.msra.mxu0 %v1628
      %1678 = vmatpush.msra.mxu0 %v1595
      %1679 = vmatpush.msra.mxu0 %v1593
      %1680 = vmatpush.msra.mxu0 %v1571
      %1681 = vmatpush.msra.mxu0 %v1556
      %1682 = vmatpush.msra.mxu0 %v1554
      %1683 = vmatpush.msra.mxu0 %v1532
      %1684 = vmatpush.msra.mxu0 %v1517
      %1685 = vmatpush.msra.mxu0 %v1515
      %1686 = vmatmul.f32.gmra.mxu0 %v1648
      %v1687 = vpop.f32.mrf.mxu0
      %v1688 = vadd.f32 %v1668, %v1687
      %1689 = vdwg.mxu0
      %1690 = vmatpush.msra.mxu0 %v1494
      %1691 = vmatpush.msra.mxu0 %v1479
      %1692 = vmatpush.msra.mxu0 %v1477
      %1693 = vmatpush.msra.mxu0 %v1455
      %1694 = vmatpush.msra.mxu0 %v1440
      %1695 = vmatpush.msra.mxu0 %v1438
      %1696 = vmatpush.msra.mxu0 %v1416
      %1697 = vmatpush.msra.mxu0 %v1401
      %1698 = vmatpush.msra.mxu0 %v1399
      %1699 = vmatpush.msra.mxu0 %v1377
      %1700 = vmatpush.msra.mxu0 %v1362
      %1701 = vmatpush.msra.mxu0 %v1360
      %1702 = vmatpush.msra.mxu0 %v1338
      %1703 = vmatpush.msra.mxu0 %v1255
      %1704 = vmatpush.msra.mxu0 %v1253
      %1705 = vmatpush.msra.mxu0 %v1251
      %1706 = vmatmul.f32.gmra.mxu0 %v1214
      %v1707 = vpop.f32.mrf.mxu0
      %v1708 = vadd.f32 %v1644, %v1707
      %1709 = vdwg.mxu0
      %1710 = vmatpush.msra.mxu0 0.0
      %1711 = vmatpush.msra.mxu0 0.0
      %1712 = vmatpush.msra.mxu0 0.0
      %1713 = vmatpush.msra.mxu0 0.0
      %1714 = vmatpush.msra.mxu0 0.0
      %1715 = vmatpush.msra.mxu0 %v1633
      %1716 = vmatpush.msra.mxu0 %v1631
      %1717 = vmatpush.msra.mxu0 %v1629
      %1718 = vmatpush.msra.mxu0 %v1596
      %1719 = vmatpush.msra.mxu0 %v1594
      %1720 = vmatpush.msra.mxu0 %v1572
      %1721 = vmatpush.msra.mxu0 %v1557
      %1722 = vmatpush.msra.mxu0 %v1555
      %1723 = vmatpush.msra.mxu0 %v1533
      %1724 = vmatpush.msra.mxu0 %v1518
      %1725 = vmatpush.msra.mxu0 %v1516
      %1726 = vmatmul.f32.gmra.mxu0 %v1648
      %v1727 = vpop.f32.mrf.mxu0
      %v1728 = vadd.f32 %v1708, %v1727
      %1729 = vdwg.mxu0
      %v1730 = vmax.f32 %v1688, 0.0
      %v1731 = vmax.f32 %v1728, 0.0
      %v1732 = vld [vmem:[%s10] sm:$0x7]
      %v1733 = vld [vmem:[%s11] sm:$0x7]
      %1735 = vset.pattern.permute.xlu0 0
      %1736 = vperm.xlu0 %1735, %v1733
      %v1737 = vpop.permute.xlu0 %1736
      %vm1739 = vcmask 64512
      %v1741 = vsel %vm1739, %v1732, 0
      %1743 = vmatpush.msra.mxu0 0.0
      %1744 = vmatpush.msra.mxu0 0.0
      %1745 = vmatpush.msra.mxu0 0.0
      %1746 = vmatpush.msra.mxu0 0.0
      %1747 = vmatpush.msra.mxu0 0.0
      %1748 = vmatpush.msra.mxu0 0.0
      %1749 = vmatpush.msra.mxu0 0.0
      %1750 = vmatpush.msra.mxu0 0.0
      %1751 = vmatpush.msra.mxu0 0.0
      %1752 = vmatpush.msra.mxu0 0.0
      %1753 = vmatpush.msra.mxu0 0.0
      %1754 = vmatpush.msra.mxu0 0.0
      %1755 = vmatpush.msra.mxu0 0.0
      %1756 = vmatpush.msra.mxu0 0.0
      %1757 = vmatpush.msra.mxu0 0.0
      %1758 = vmatpush.msra.mxu0 %v1730
      %1759 = vmatmul.f32.gmra.mxu0 %v1741
      %v1760 = vpop.f32.mrf.mxu0
      %v1761 = vadd.f32 %v1737, %v1760
      %1762 = vdwg.mxu0
      %1763 = vmatpush.msra.mxu0 0.0
      %1764 = vmatpush.msra.mxu0 0.0
      %1765 = vmatpush.msra.mxu0 0.0
      %1766 = vmatpush.msra.mxu0 0.0
      %1767 = vmatpush.msra.mxu0 0.0
      %1768 = vmatpush.msra.mxu0 0.0
      %1769 = vmatpush.msra.mxu0 0.0
      %1770 = vmatpush.msra.mxu0 0.0
      %1771 = vmatpush.msra.mxu0 0.0
      %1772 = vmatpush.msra.mxu0 0.0
      %1773 = vmatpush.msra.mxu0 0.0
      %1774 = vmatpush.msra.mxu0 0.0
      %1775 = vmatpush.msra.mxu0 0.0
      %1776 = vmatpush.msra.mxu0 0.0
      %1777 = vmatpush.msra.mxu0 0.0
      %1778 = vmatpush.msra.mxu0 %v1731
      %1779 = vmatmul.f32.gmra.mxu0 %v1741
      %v1780 = vpop.f32.mrf.mxu0
      %v1781 = vadd.f32 %v1737, %v1780
      %1782 = vdwg.mxu0
      %v1785 = vrot.slane %v1781, 4
      %v1786 = vsel %vm693, %v1761, %v1785
      %1788 = vst [vmem:[%s413] sm:$0x77] %v1786
      %p1789 = scmp.lt.s32.totalorder %s23, 1
      %s1790 = scalar_select %p1789, %s23, 1
      %s1791 = smul.addr %s1790, 2
      %s1792 = smul.addr %s1791, 4
      %s1793 = scalar_lea.vmem %s12, %s1792
      // Predicated region
      $region69: #{full_model_single.1} parent=67 // pred_check
        %p1794 = pneg %p298
      $region70: #{full_model_single.1} parent=67 // pred_check_branch
        %1796 = sbr.rel (%p1794) target = $region72
      $region71: #{full_model_single.1} parent=67 // pred_region
        _
      $region72: #{full_model_single.1} parent=67 // pred_fallthru
        _
    $region68: #{full_model_single.1} parent=5 // pred_fallthru
      _
    %p1797 = scmp.le.s32.totalorder 2, %s18
    // Predicated region
    $region73: #{full_model_single.1} parent=5 // pred_check
      %p1798 = pneg %p1797
    $region74: #{full_model_single.1} parent=5 // pred_check_branch
      %1800 = sbr.rel (%p1798) target = $region76
    $region75: #{full_model_single.1} parent=5 // pred_region
      %s1801 = ssub.s32 %s18, 2
      // Predicated region
      $region77: #{full_model_single.1} parent=75 // pred_check
        %p1802 = pneg %p304
      $region78: #{full_model_single.1} parent=75 // pred_check_branch
        %1804 = sbr.rel (%p1802) target = $region80
      $region79: #{full_model_single.1} parent=75 // pred_region
        %p1805 = scmp.lt.s32.totalorder %s24, 1
        %s1806 = scalar_select %p1805, %s24, 1
        %s1807 = smul.addr %s1806, 2
        %s1808 = smul.addr %s1807, 4
        %s1809 = scalar_lea.vmem %s12, %s1808
      $region80: #{full_model_single.1} parent=75 // pred_fallthru
        _
    $region76: #{full_model_single.1} parent=5 // pred_fallthru
      _
  $region6: #{full_model_single.1} parent=0 // loop_footer
    %s22 = sadd.s32 1, %s18
  $region7: #{full_model_single.1} parent=0 // loop_footer_branch
    %17 = sbr.rel target = $region3
  $region8: #{full_model_single.1} parent=0 // loop_exit
    _

</llo_original>
